<compile_context>
chip_gen: v7x
topology: tpu7x:2x2x1
jax: 0.10.0
libtpu: 0.0.40
codegen_flags: <defaults>
</compile_context>

<pallas_src>
import functools

import jax
import jax.numpy as jnp
from jax import lax
from jax.experimental import pallas as pl
from jax.experimental.pallas import tpu as pltpu
import numpy as np

_BN_EPS = 1e-3


def _round_up(x, m):
    return ((x + m - 1) // m) * m


def _cdiv(a, b):
    return -(-a // b)


def _res_spec(shape):
    """Full-array block with a constant index map (stays VMEM-resident across the grid)."""
    shape = tuple(int(s) for s in shape)
    zeros = (0,) * len(shape)
    return pl.BlockSpec(shape, lambda *_: zeros)


def _stream_spec(tile, c, bufs=None):
    """Row-streamed (tile, C) block; optionally request deeper pipelining (Buffered)."""
    idx = lambda t: (t, 0)
    if bufs is not None and bufs > 2 and hasattr(pl, "Buffered"):
        try:
            return pl.BlockSpec((tile, c), idx, pipeline_mode=pl.Buffered(bufs))
        except TypeError:          # older jax without pipeline_mode: fall back silently
            pass
    return pl.BlockSpec((tile, c), idx)


def _vmem_limit_bytes():
    """Generation-aware scoped VMEM limit: ~104 MiB on v5e/v6e (128 MiB), ~40 MiB on v7x (64 MiB)."""
    cap = 64 * 1024 * 1024                     # conservative default (v7x per-core VMEM)
    try:
        cap = int(getattr(pltpu.get_tpu_info(), "vmem_capacity_bytes", cap))
    except Exception:
        pass
    return int(min(max(cap - 24 * 1024 * 1024, 32 * 1024 * 1024), 112 * 1024 * 1024))


# ----------------------------------------------------------------------------- kernels


def _make_forward_kernel(n_applied, fused_bn):
    """Full forward (conv/ReLU + BN chain, ctr_reg, offset clamp) on a (rows, channels) tile.

    fused_bn=True  -> the tile is the whole batch; BN statistics are computed in-kernel
                      (two-pass mean/variance over the row axis, no cancellation risk).
    fused_bn=False -> BN mean / rstd are precomputed by the stats passes and passed as (1, C) refs.
    """
    n_conv = (n_applied + 1) // 2
    n_bn = n_applied // 2

    def kernel(*refs):
        xyz_ref, pts_ref = refs[0], refs[1]
        i0 = 2
        if fused_bn:
            bn_refs = ()
        else:
            bn_refs = refs[i0:i0 + 2 * n_bn]
            i0 += 2 * n_bn
        conv_refs = refs[i0:i0 + 2 * n_conv]
        i0 += 2 * n_conv
        wc_ref, bc_ref, mo_ref = refs[i0], refs[i0 + 1], refs[i0 + 2]
        new_xyz_ref, feat_ref, ctr_ref = refs[-3], refs[-2], refs[-1]

        h = pts_ref[...]                                            # (T, C_pre)
        for i in range(n_applied):                                  # conv0, bn0, conv1, ...
            q = i // 2
            if i % 2 == 0:
                h = jnp.maximum(
                    jnp.dot(h, conv_refs[2 * q][...],
                            preferred_element_type=jnp.float32)
                    + conv_refs[2 * q + 1][...], 0.0)
            elif fused_bn:
                m = jnp.mean(h, axis=0, keepdims=True)              # (1, C) sublane reduce
                d = h - m
                v = jnp.mean(d * d, axis=0, keepdims=True)          # biased var (training BN)
                h = d * lax.rsqrt(v + _BN_EPS)
            else:
                h = (h - bn_refs[2 * q][...]) * bn_refs[2 * q + 1][...]

        feat_ref[...] = h                                           # (T, c_feat)

        ctr = jnp.dot(h, wc_ref[...], preferred_element_type=jnp.float32) + bc_ref[...]
        ctr_ref[...] = ctr                                          # (T, 3)

        # Mirror the two torch.where calls exactly (argument order preserved -> identical NaN
        # behaviour; with negative MAX_TRANSLATE_RANGE this is clamp(ctr, mo, -mo)).
        mo = mo_ref[...]                                            # (1, 3)
        nmo = -mo
        lim = jnp.where(ctr > mo, ctr, mo)
        lim = jnp.where(lim < nmo, lim, nmo)
        new_xyz_ref[...] = xyz_ref[...] + lim

    return kernel


def _make_stats_kernel(p, tile_r, r_true, divisible):
    """Stats pass for BatchNorm #p: recompute through conv_p, emit per-tile sum / sum-of-squares.

    refs: pts, (mean_q, rstd_q) for q<p, (wT_q, b_q) for q<=p  |  output: one (8, C_out) partial
    block per tile with row 0 = sum, row 1 = sum of squares, rows 2..7 = 0.  The grid axis is
    'parallel' so both TensorCores contribute on v7x; the tiny cross-tile reduction and the
    mean / rsqrt(var+eps) finalize happen in the wrapper.
    """
    n_prior = p
    n_conv = p + 1

    def kernel(*refs):
        pts_ref = refs[0]
        prior_refs = refs[1:1 + 2 * n_prior]
        conv_refs = refs[1 + 2 * n_prior:1 + 2 * n_prior + 2 * n_conv]
        part_ref = refs[-1]

        h = pts_ref[...]                                            # (T, C_pre)
        for q in range(n_conv):
            h = jnp.maximum(
                jnp.dot(h, conv_refs[2 * q][...],
                        preferred_element_type=jnp.float32)
                + conv_refs[2 * q + 1][...], 0.0)
            if q < n_prior:                                         # previously computed BNs
                h = (h - prior_refs[2 * q][...]) * prior_refs[2 * q + 1][...]

        if not divisible:                                           # mask rows past the batch end
            row = (lax.broadcasted_iota(jnp.int32, h.shape, 0)
                   + pl.program_id(0) * tile_r)
            h = jnp.where(row < r_true, h, 0.0)

        s = jnp.sum(h, axis=0, keepdims=True)                       # (1, C_out)
        sq = jnp.sum(h * h, axis=0, keepdims=True)
        ridx = lax.broadcasted_iota(jnp.int32, (8, h.shape[1]), 0)
        part_ref[...] = jnp.where(ridx == 0, s, jnp.where(ridx == 1, sq, 0.0))

    return kernel


# ----------------------------------------------------------------------------- wrapper


@functools.partial(jax.jit,
                   static_argnames=("max_translate_range", "tile_r", "force_streaming"))
def vote_layer_forward(xyz, points, params, max_translate_range,
                       tile_r=None, force_streaming=False):
    """Vote_layer forward.

    xyz:    (B, N, 3)    points: (B, N, C_pre)
    params: 'conv_w': list of (C_out, C_in), 'conv_b': list of (C_out, 1),
            'ctr_w': (3, C_last), 'ctr_b': (3, 1)      (PyTorch Conv1d kernel-1 layout)
    Returns (new_xyz (B,N,3), features (B,N,C_last), ctr_offsets (B,N,3)).
    """
    B, N, _ = xyz.shape
    C_pre = points.shape[-1]
    R = B * N
    f32 = jnp.float32

    conv_w, conv_b = params["conv_w"], params["conv_b"]
    n_pairs = len(conv_w)
    assert n_pairs >= 1
    n_applied = n_pairs + 1                 # forward loop length = len([pre] + mlp_list)
    n_conv = (n_applied + 1) // 2           # convs actually applied
    n_bn = n_applied // 2                   # BNs actually applied
    mlp_full = [C_pre] + [int(w.shape[0]) for w in conv_w]
    c_feat = mlp_full[n_conv]
    assert params["ctr_w"].shape[1] == c_feat, "ctr_reg input channels mismatch"

    # ---- rows-on-sublane layout (B*N, C): reshapes from (B, N, C) are free -> no transposes,
    # no pads of the large tensors anywhere in the wrapper.
    pts2 = points.reshape(R, C_pre).astype(f32)
    xyz2 = xyz.reshape(R, 3).astype(f32)

    # tiny parameter re-layouts (<= 64x64 each)
    wT = [jnp.transpose(conv_w[q]).astype(f32) for q in range(n_conv)]       # (C_in, C_out)
    bT = [jnp.reshape(conv_b[q], (1, -1)).astype(f32) for q in range(n_conv)]
    ctr_wT = jnp.transpose(params["ctr_w"]).astype(f32)                      # (c_feat, 3)
    ctr_bT = jnp.reshape(params["ctr_b"], (1, 3)).astype(f32)
    mo = jnp.asarray(max_translate_range, f32).reshape(1, 3)

    vmem_limit = _vmem_limit_bytes()
    conv_flops = 2 * R * sum(mlp_full[q] * mlp_full[q + 1] for q in range(n_conv))

    # ---------------- fused fast path: whole problem resident in VMEM (one pallas_call) --------
    chan_total = 3 + C_pre + sum(mlp_full[1:n_conv + 1]) + c_feat + 6
    approx_bytes = 4 * R * chan_total * 2           # x2 headroom for compiler temporaries
    use_fused = (not force_streaming) and (approx_bytes <= vmem_limit // 2)

    if use_fused:
        args = [xyz2, pts2]
        specs = [_res_spec((R, 3)), _res_spec((R, C_pre))]
        for q in range(n_conv):
            args += [wT[q], bT[q]]
            specs += [_res_spec(wT[q].shape), _res_spec(bT[q].shape)]
        args += [ctr_wT, ctr_bT, mo]
        specs += [_res_spec(ctr_wT.shape), _res_spec((1, 3)), _res_spec((1, 3))]

        new_xyz2, feat2, ctr2 = pl.pallas_call(
            _make_forward_kernel(n_applied, fused_bn=True),
            grid=(1,),
            in_specs=specs,
            out_specs=(_res_spec((R, 3)), _res_spec((R, c_feat)), _res_spec((R, 3))),
            out_shape=(jax.ShapeDtypeStruct((R, 3), f32),
                       jax.ShapeDtypeStruct((R, c_feat), f32),
                       jax.ShapeDtypeStruct((R, 3), f32)),
            compiler_params=pltpu.CompilerParams(
                dimension_semantics=("arbitrary",),
                vmem_limit_bytes=vmem_limit),
            cost_estimate=pl.CostEstimate(
                flops=int(conv_flops + 2 * R * 3 * c_feat),
                transcendentals=0,
                bytes_accessed=int(4 * R * chan_total)),
        )(*args)
        return (new_xyz2.reshape(B, N, 3), feat2.reshape(B, N, c_feat),
                ctr2.reshape(B, N, 3))

    # ---------------- streaming path: row-tiled BN-stats passes + one apply pass ----------------
    if tile_r is None:
        tile_r = 4096                                   # ~1-3 MiB of activations per tile
    tile_r = max(8, _round_up(min(int(tile_r), _round_up(R, 8)), 8))
    if R >= 4096:                                       # keep >=4 tiles so v7x megacore has work
        tile_r = min(tile_r, max(1024, _round_up(_cdiv(R, 4), 8)))
    num_tiles = _cdiv(R, tile_r)
    divisible = (R % tile_r == 0)
    # NOTE: when tile_r does not divide R we rely on Pallas block clipping: out-of-bounds rows are
    # masked out of the BN statistics in-kernel and dropped on output writeback (no jnp.pad copy).

    cp = pltpu.CompilerParams(dimension_semantics=("parallel",),
                              vmem_limit_bytes=vmem_limit)

    # ---- phase 1..n_bn: global batch statistics for every applied BatchNorm
    bn_stats = []
    for p in range(n_bn):
        c_out = mlp_full[p + 1]
        args = [pts2]
        specs = [_stream_spec(tile_r, C_pre, bufs=3)]
        for q in range(p):
            args += [bn_stats[q][0], bn_stats[q][1]]
            specs += [_res_spec(bn_stats[q][0].shape), _res_spec(bn_stats[q][1].shape)]
        for q in range(p + 1):
            args += [wT[q], bT[q]]
            specs += [_res_spec(wT[q].shape), _res_spec(bT[q].shape)]

        flops = 2 * R * sum(mlp_full[q] * mlp_full[q + 1] for q in range(p + 1))
        bytes_acc = 4 * (R * C_pre + num_tiles * 8 * c_out
                         + sum(int(a.size) for a in args[1:]))
        part = pl.pallas_call(
            _make_stats_kernel(p, tile_r, R, divisible),
            grid=(num_tiles,),
            in_specs=specs,
            out_specs=pl.BlockSpec((8, c_out), lambda t: (t, 0)),
            out_shape=jax.ShapeDtypeStruct((8 * num_tiles, c_out), f32),
            compiler_params=cp,
            cost_estimate=pl.CostEstimate(flops=int(flops), transcendentals=0,
                                          bytes_accessed=int(bytes_acc)),
        )(*args)
        part = part.reshape(num_tiles, 8, c_out)
        s = jnp.sum(part[:, 0, :], axis=0)               # tiny XLA finalize reductions
        sq = jnp.sum(part[:, 1, :], axis=0)
        mean = s / R
        var = jnp.maximum(sq / R - mean * mean, 0.0)      # biased var (training-mode BN)
        rstd = lax.rsqrt(var + _BN_EPS)
        bn_stats.append((mean.reshape(1, c_out), rstd.reshape(1, c_out)))

    # ---- final phase: full forward + ctr_reg + clamp, row-parallel tiles
    args = [xyz2, pts2]
    specs = [_stream_spec(tile_r, 3, bufs=3), _stream_spec(tile_r, C_pre, bufs=3)]
    for q in range(n_bn):
        args += [bn_stats[q][0], bn_stats[q][1]]
        specs += [_res_spec(bn_stats[q][0].shape), _res_spec(bn_stats[q][1].shape)]
    for q in range(n_conv):
        args += [wT[q], bT[q]]
        specs += [_res_spec(wT[q].shape), _res_spec(bT[q].shape)]
    args += [ctr_wT, ctr_bT, mo]
    specs += [_res_spec(ctr_wT.shape), _res_spec((1, 3)), _res_spec((1, 3))]

    flops = conv_flops + 2 * R * 3 * c_feat
    bytes_acc = 4 * (R * (3 + C_pre + c_feat + 6) + sum(int(a.size) for a in args[2:]))

    new_xyz2, feat2, ctr2 = pl.pallas_call(
        _make_forward_kernel(n_applied, fused_bn=False),
        grid=(num_tiles,),
        in_specs=specs,
        out_specs=(_stream_spec(tile_r, 3),
                   _stream_spec(tile_r, c_feat),
                   _stream_spec(tile_r, 3)),
        out_shape=(jax.ShapeDtypeStruct((R, 3), f32),
                   jax.ShapeDtypeStruct((R, c_feat), f32),
                   jax.ShapeDtypeStruct((R, 3), f32)),
        compiler_params=cp,
        cost_estimate=pl.CostEstimate(flops=int(flops), transcendentals=0,
                                      bytes_accessed=int(bytes_acc)),
    )(*args)

    return (new_xyz2.reshape(B, N, 3), feat2.reshape(B, N, c_feat),
            ctr2.reshape(B, N, 3))


# ----------------------------------------------------------------------------- reference


def vote_layer_reference(xyz, points, params, max_translate_range):
    """Pure-JAX reference of the same forward (PyTorch semantics)."""
    B, N, _ = xyz.shape
    C_pre = points.shape[-1]
    R = B * N
    h = points.reshape(R, C_pre).astype(jnp.float32)
    n_pairs = len(params["conv_w"])
    for i in range(n_pairs + 1):
        q = i // 2
        if i % 2 == 0:
            h = jnp.maximum(h @ params["conv_w"][q].T
                            + params["conv_b"][q].reshape(1, -1), 0.0)
        else:
            m = jnp.mean(h, axis=0, keepdims=True)
            v = jnp.mean(jnp.square(h - m), axis=0, keepdims=True)
            h = (h - m) / jnp.sqrt(v + _BN_EPS)
    ctr = h @ params["ctr_w"].T + params["ctr_b"].reshape(1, -1)
    mo = jnp.asarray(max_translate_range, jnp.float32).reshape(1, 3)
    lim = jnp.where(ctr > mo, ctr, mo)
    lim = jnp.where(lim < -mo, lim, -mo)
    new_xyz = xyz.reshape(R, 3) + lim
    c_feat = h.shape[1]
    return (new_xyz.reshape(B, N, 3), h.reshape(B, N, c_feat), ctr.reshape(B, N, 3))


def init_params(key, pre_channel, mlp_list):
    """Deterministic synthetic parameters (shapes per Vote_layer.__init__, PyTorch layout)."""
    mlp_full = [pre_channel] + list(mlp_list)
    conv_w, conv_b = [], []
    for i in range(len(mlp_full) - 1):
        key, k1, k2 = jax.random.split(key, 3)
        conv_w.append(jax.random.normal(k1, (mlp_full[i + 1], mlp_full[i]), jnp.float32)
                      / np.sqrt(mlp_full[i]))
        conv_b.append(0.01 * jax.random.normal(k2, (mlp_full[i + 1], 1), jnp.float32))
    key, k1, k2 = jax.random.split(key, 3)
    ctr_w = jax.random.normal(k1, (3, mlp_full[-1]), jnp.float32) / np.sqrt(mlp_full[-1])
    ctr_b = 0.01 * jax.random.normal(k2, (3, 1), jnp.float32)
    return {"conv_w": conv_w, "conv_b": conv_b, "ctr_w": ctr_w, "ctr_b": ctr_b}


# ----------------------------------------------------------------------------- main


if __name__ == "__main__":
    # NOTE: bn_decay only changes the BatchNorm running-stats momentum in PyTorch; it does not
    # affect the training-mode forward output, so it has no kernel-side equivalent here.
    def run_case(key, B, N, C_pre, mlp_list, mtr, tile_r=None, force_streaming=False):
        key, kx, kp, kw = jax.random.split(key, 4)
        xyz = jax.random.normal(kx, (B, N, 3), jnp.float32)
        points = jax.random.normal(kp, (B, N, C_pre), jnp.float32)
        params = init_params(kw, C_pre, mlp_list)

        out = vote_layer_forward(xyz, points, params, max_translate_range=mtr,
                                 tile_r=tile_r, force_streaming=force_streaming)
        jax.block_until_ready(out)

        ref = vote_layer_reference(xyz, points, params, mtr)
        for got, want in zip(out, ref):
            np.testing.assert_allclose(np.asarray(got), np.asarray(want),
                                       rtol=1e-3, atol=1e-3)

    key = jax.random.PRNGKey(0)
    k1, k2, k3, k4 = jax.random.split(key, 4)

    # Case A (fused path): mlp_list=(32, 32) -> applied layers are conv0+ReLU, BN0, conv1+ReLU
    # (final BN skipped, as in the PyTorch forward loop).
    run_case(k1, B=2, N=192, C_pre=8, mlp_list=(32, 32), mtr=(-3.0, -3.0, -2.0))

    # Case B (fused path): mlp_list=(64,) -> conv0+ReLU then BN0 is the last applied layer.
    run_case(k2, B=2, N=80, C_pre=16, mlp_list=(64,), mtr=(-2.0, -2.0, -1.0))

    # Case C (streaming path forced): 2048 rows, 4 row tiles of 512 -> exercises the parallel
    # stats pass (per-tile partial sums) + the row-parallel apply pass.
    run_case(k3, B=2, N=1024, C_pre=8, mlp_list=(32, 32), mtr=(-3.0, -3.0, -2.0),
             tile_r=512, force_streaming=True)

    # Case D (streaming path forced): BN-last variant, 1024 rows in 4 tiles of 256.
    run_case(k4, B=2, N=512, C_pre=16, mlp_list=(64,), mtr=(-2.0, -2.0, -1.0),
             tile_r=256, force_streaming=True)

    print("KERNEL_OK")
</pallas_src>

<mosaic_0001>
module attributes {stable_mosaic.version = 11 : i64} {
  func.func @kernel(%arg0: i32, %arg1: memref<384x3xf32, #tpu.memory_space<vmem>>, %arg2: memref<384x8xf32, #tpu.memory_space<vmem>>, %arg3: memref<8x32xf32, #tpu.memory_space<vmem>>, %arg4: memref<1x32xf32, #tpu.memory_space<vmem>>, %arg5: memref<32x32xf32, #tpu.memory_space<vmem>>, %arg6: memref<1x32xf32, #tpu.memory_space<vmem>>, %arg7: memref<32x3xf32, #tpu.memory_space<vmem>>, %arg8: memref<1x3xf32, #tpu.memory_space<vmem>>, %arg9: memref<1x3xf32, #tpu.memory_space<vmem>>, %arg10: memref<384x3xf32, #tpu.memory_space<vmem>>, %arg11: memref<384x32xf32, #tpu.memory_space<vmem>>, %arg12: memref<384x3xf32, #tpu.memory_space<vmem>>) attributes {dimension_semantics = [#tpu.dimension_semantics<arbitrary>], iteration_bounds = array<i64: 1>, scalar_prefetch = 0 : i64, scratch_operands = 0 : i64, tpu.core_type = #tpu.core_type<tc>, window_params = [{pipeline_mode = #tpu.pipeline_mode<synchronous>, transform_indices = @transform_0, window_bounds = array<i64: 384, 3>}, {pipeline_mode = #tpu.pipeline_mode<synchronous>, transform_indices = @transform_1, window_bounds = array<i64: 384, 8>}, {pipeline_mode = #tpu.pipeline_mode<synchronous>, transform_indices = @transform_2, window_bounds = array<i64: 8, 32>}, {pipeline_mode = #tpu.pipeline_mode<synchronous>, transform_indices = @transform_3, window_bounds = array<i64: 1, 32>}, {pipeline_mode = #tpu.pipeline_mode<synchronous>, transform_indices = @transform_4, window_bounds = array<i64: 32, 32>}, {pipeline_mode = #tpu.pipeline_mode<synchronous>, transform_indices = @transform_5, window_bounds = array<i64: 1, 32>}, {pipeline_mode = #tpu.pipeline_mode<synchronous>, transform_indices = @transform_6, window_bounds = array<i64: 32, 3>}, {pipeline_mode = #tpu.pipeline_mode<synchronous>, transform_indices = @transform_7, window_bounds = array<i64: 1, 3>}, {pipeline_mode = #tpu.pipeline_mode<synchronous>, transform_indices = @transform_8, window_bounds = array<i64: 1, 3>}, {pipeline_mode = #tpu.pipeline_mode<synchronous>, transform_indices = @transform_9, window_bounds = array<i64: 384, 3>}, {pipeline_mode = #tpu.pipeline_mode<synchronous>, transform_indices = @transform_10, window_bounds = array<i64: 384, 32>}, {pipeline_mode = #tpu.pipeline_mode<synchronous>, transform_indices = @transform_11, window_bounds = array<i64: 384, 3>}]} {
    %c0 = arith.constant 0 : index
    %c0_0 = arith.constant 0 : index
    %0 = vector.load %arg2[%c0, %c0_0] : memref<384x8xf32, #tpu.memory_space<vmem>>, vector<384x8xf32>
    %c0_1 = arith.constant 0 : index
    %c0_2 = arith.constant 0 : index
    %1 = vector.load %arg3[%c0_1, %c0_2] : memref<8x32xf32, #tpu.memory_space<vmem>>, vector<8x32xf32>
    %cst = arith.constant dense<0.000000e+00> : vector<384x32xf32>
    %2 = tpu.matmul %0, %1, %cst {dimension_numbers = #tpu.dot_dimension_numbers<[1], [0], [0], [1], [0, 0, 1, 1], [], []>} : vector<384x8xf32>, vector<8x32xf32>, vector<384x32xf32> -> vector<384x32xf32>
    %c0_3 = arith.constant 0 : index
    %c0_4 = arith.constant 0 : index
    %3 = vector.load %arg4[%c0_3, %c0_4] : memref<1x32xf32, #tpu.memory_space<vmem>>, vector<1x32xf32>
    %4 = vector.broadcast %3 : vector<1x32xf32> to vector<384x32xf32>
    %5 = arith.addf %2, %4 : vector<384x32xf32>
    %cst_5 = arith.constant 0.000000e+00 : f32
    %6 = vector.broadcast %cst_5 : f32 to vector<384x32xf32>
    %7 = arith.maximumf %5, %6 : vector<384x32xf32>
    %cst_6 = arith.constant dense<0.000000e+00> : vector<32xf32>
    %8 = vector.multi_reduction <add>, %7, %cst_6 [0] : vector<384x32xf32> to vector<32xf32>
    %9 = vector.shape_cast %8 : vector<32xf32> to vector<1x32xf32>
    %cst_7 = arith.constant 3.840000e+02 : f32
    %10 = vector.broadcast %cst_7 : f32 to vector<1x32xf32>
    %11 = arith.divf %9, %10 : vector<1x32xf32>
    %12 = vector.broadcast %11 : vector<1x32xf32> to vector<384x32xf32>
    %13 = arith.subf %7, %12 : vector<384x32xf32>
    %14 = arith.mulf %13, %13 : vector<384x32xf32>
    %cst_8 = arith.constant dense<0.000000e+00> : vector<32xf32>
    %15 = vector.multi_reduction <add>, %14, %cst_8 [0] : vector<384x32xf32> to vector<32xf32>
    %16 = vector.shape_cast %15 : vector<32xf32> to vector<1x32xf32>
    %cst_9 = arith.constant 3.840000e+02 : f32
    %17 = vector.broadcast %cst_9 : f32 to vector<1x32xf32>
    %18 = arith.divf %16, %17 : vector<1x32xf32>
    %cst_10 = arith.constant 1.000000e-03 : f32
    %19 = vector.broadcast %cst_10 : f32 to vector<1x32xf32>
    %20 = arith.addf %18, %19 : vector<1x32xf32>
    %21 = math.rsqrt %20 : vector<1x32xf32>
    %22 = vector.broadcast %21 : vector<1x32xf32> to vector<384x32xf32>
    %23 = arith.mulf %13, %22 : vector<384x32xf32>
    %c0_11 = arith.constant 0 : index
    %c0_12 = arith.constant 0 : index
    %24 = vector.load %arg5[%c0_11, %c0_12] : memref<32x32xf32, #tpu.memory_space<vmem>>, vector<32x32xf32>
    %cst_13 = arith.constant dense<0.000000e+00> : vector<384x32xf32>
    %25 = tpu.matmul %23, %24, %cst_13 {dimension_numbers = #tpu.dot_dimension_numbers<[1], [0], [0], [1], [0, 0, 1, 1], [], []>} : vector<384x32xf32>, vector<32x32xf32>, vector<384x32xf32> -> vector<384x32xf32>
    %c0_14 = arith.constant 0 : index
    %c0_15 = arith.constant 0 : index
    %26 = vector.load %arg6[%c0_14, %c0_15] : memref<1x32xf32, #tpu.memory_space<vmem>>, vector<1x32xf32>
    %27 = vector.broadcast %26 : vector<1x32xf32> to vector<384x32xf32>
    %28 = arith.addf %25, %27 : vector<384x32xf32>
    %cst_16 = arith.constant 0.000000e+00 : f32
    %29 = vector.broadcast %cst_16 : f32 to vector<384x32xf32>
    %30 = arith.maximumf %28, %29 : vector<384x32xf32>
    %c0_17 = arith.constant 0 : index
    %c0_18 = arith.constant 0 : index
    %31 = vector.load %arg11[%c0_17, %c0_18] : memref<384x32xf32, #tpu.memory_space<vmem>>, vector<384x32xf32>
    tpu.vector_store %arg11[%c0_17, %c0_18], %30 {strides = array<i32>} : memref<384x32xf32, #tpu.memory_space<vmem>>, vector<384x32xf32>,
    %c0_19 = arith.constant 0 : index
    %c0_20 = arith.constant 0 : index
    %32 = vector.load %arg7[%c0_19, %c0_20] : memref<32x3xf32, #tpu.memory_space<vmem>>, vector<32x3xf32>
    %cst_21 = arith.constant dense<0.000000e+00> : vector<384x3xf32>
    %33 = tpu.matmul %30, %32, %cst_21 {dimension_numbers = #tpu.dot_dimension_numbers<[1], [0], [0], [1], [0, 0, 1, 1], [], []>} : vector<384x32xf32>, vector<32x3xf32>, vector<384x3xf32> -> vector<384x3xf32>
    %c0_22 = arith.constant 0 : index
    %c0_23 = arith.constant 0 : index
    %34 = vector.load %arg8[%c0_22, %c0_23] : memref<1x3xf32, #tpu.memory_space<vmem>>, vector<1x3xf32>
    %35 = vector.broadcast %34 : vector<1x3xf32> to vector<384x3xf32>
    %36 = arith.addf %33, %35 : vector<384x3xf32>
    %c0_24 = arith.constant 0 : index
    %c0_25 = arith.constant 0 : index
    %37 = vector.load %arg12[%c0_24, %c0_25] : memref<384x3xf32, #tpu.memory_space<vmem>>, vector<384x3xf32>
    tpu.vector_store %arg12[%c0_24, %c0_25], %36 {strides = array<i32>} : memref<384x3xf32, #tpu.memory_space<vmem>>, vector<384x3xf32>,
    %c0_26 = arith.constant 0 : index
    %c0_27 = arith.constant 0 : index
    %38 = vector.load %arg9[%c0_26, %c0_27] : memref<1x3xf32, #tpu.memory_space<vmem>>, vector<1x3xf32>
    %cst_28 = arith.constant 0.000000e+00 : f32
    %39 = vector.broadcast %cst_28 : f32 to vector<1x3xf32>
    %40 = arith.subf %39, %38 : vector<1x3xf32>
    %41 = vector.broadcast %38 : vector<1x3xf32> to vector<384x3xf32>
    %42 = arith.cmpf ogt, %36, %41 : vector<384x3xf32>
    %43 = vector.shape_cast %38 : vector<1x3xf32> to vector<1x3xf32>
    %44 = vector.broadcast %43 : vector<1x3xf32> to vector<384x3xf32>
    %45 = arith.select %42, %36, %44 : vector<384x3xi1>, vector<384x3xf32>
    %46 = vector.broadcast %40 : vector<1x3xf32> to vector<384x3xf32>
    %47 = arith.cmpf olt, %45, %46 : vector<384x3xf32>
    %48 = vector.shape_cast %40 : vector<1x3xf32> to vector<1x3xf32>
    %49 = vector.broadcast %48 : vector<1x3xf32> to vector<384x3xf32>
    %50 = arith.select %47, %45, %49 : vector<384x3xi1>, vector<384x3xf32>
    %c0_29 = arith.constant 0 : index
    %c0_30 = arith.constant 0 : index
    %51 = vector.load %arg1[%c0_29, %c0_30] : memref<384x3xf32, #tpu.memory_space<vmem>>, vector<384x3xf32>
    %52 = arith.addf %51, %50 : vector<384x3xf32>
    %c0_31 = arith.constant 0 : index
    %c0_32 = arith.constant 0 : index
    %53 = vector.load %arg10[%c0_31, %c0_32] : memref<384x3xf32, #tpu.memory_space<vmem>>, vector<384x3xf32>
    tpu.vector_store %arg10[%c0_31, %c0_32], %52 {strides = array<i32>} : memref<384x3xf32, #tpu.memory_space<vmem>>, vector<384x3xf32>,
    return
  }
  func.func @transform_0(%arg0: i32) -> (i32, i32) {
    %c0_i32 = arith.constant 0 : i32
    %c0_i32_0 = arith.constant 0 : i32
    %c0_i32_1 = arith.constant 0 : i32
    return %c0_i32, %c0_i32_0 : i32, i32
  }
  func.func @transform_1(%arg0: i32) -> (i32, i32) {
    %c0_i32 = arith.constant 0 : i32
    %c0_i32_0 = arith.constant 0 : i32
    %c0_i32_1 = arith.constant 0 : i32
    return %c0_i32, %c0_i32_0 : i32, i32
  }
  func.func @transform_2(%arg0: i32) -> (i32, i32) {
    %c0_i32 = arith.constant 0 : i32
    %c0_i32_0 = arith.constant 0 : i32
    %c0_i32_1 = arith.constant 0 : i32
    return %c0_i32, %c0_i32_0 : i32, i32
  }
  func.func @transform_3(%arg0: i32) -> (i32, i32) {
    %c0_i32 = arith.constant 0 : i32
    %c0_i32_0 = arith.constant 0 : i32
    %c0_i32_1 = arith.constant 0 : i32
    return %c0_i32, %c0_i32_0 : i32, i32
  }
  func.func @transform_4(%arg0: i32) -> (i32, i32) {
    %c0_i32 = arith.constant 0 : i32
    %c0_i32_0 = arith.constant 0 : i32
    %c0_i32_1 = arith.constant 0 : i32
    return %c0_i32, %c0_i32_0 : i32, i32
  }
  func.func @transform_5(%arg0: i32) -> (i32, i32) {
    %c0_i32 = arith.constant 0 : i32
    %c0_i32_0 = arith.constant 0 : i32
    %c0_i32_1 = arith.constant 0 : i32
    return %c0_i32, %c0_i32_0 : i32, i32
  }
  func.func @transform_6(%arg0: i32) -> (i32, i32) {
    %c0_i32 = arith.constant 0 : i32
    %c0_i32_0 = arith.constant 0 : i32
    %c0_i32_1 = arith.constant 0 : i32
    return %c0_i32, %c0_i32_0 : i32, i32
  }
  func.func @transform_7(%arg0: i32) -> (i32, i32) {
    %c0_i32 = arith.constant 0 : i32
    %c0_i32_0 = arith.constant 0 : i32
    %c0_i32_1 = arith.constant 0 : i32
    return %c0_i32, %c0_i32_0 : i32, i32
  }
  func.func @transform_8(%arg0: i32) -> (i32, i32) {
    %c0_i32 = arith.constant 0 : i32
    %c0_i32_0 = arith.constant 0 : i32
    %c0_i32_1 = arith.constant 0 : i32
    return %c0_i32, %c0_i32_0 : i32, i32
  }
  func.func @transform_9(%arg0: i32) -> (i32, i32) {
    %c0_i32 = arith.constant 0 : i32
    %c0_i32_0 = arith.constant 0 : i32
    %c0_i32_1 = arith.constant 0 : i32
    return %c0_i32, %c0_i32_0 : i32, i32
  }
  func.func @transform_10(%arg0: i32) -> (i32, i32) {
    %c0_i32 = arith.constant 0 : i32
    %c0_i32_0 = arith.constant 0 : i32
    %c0_i32_1 = arith.constant 0 : i32
    return %c0_i32, %c0_i32_0 : i32, i32
  }
  func.func @transform_11(%arg0: i32) -> (i32, i32) {
    %c0_i32 = arith.constant 0 : i32
    %c0_i32_0 = arith.constant 0 : i32
    %c0_i32_1 = arith.constant 0 : i32
    return %c0_i32, %c0_i32_0 : i32, i32
  }
}

</mosaic_0001>

<llo_original>
// kernel: vote_layer_forward.1
$region0: #{vote_layer_forward.1}
  #allocation0 [shape = 'u32[]', space=smem, size = 0x4, offset = 0x4, fixed_abs, tag = 'smem constant byte address 0x4 - core index']
  #allocation1 [shape = 'u32[144,128]{1,0:T(1,128)}', space=vmem, size = 0x12000, scoped, tag = 'internal scratch']
  %s0 = inlined_call_operand.vmem [shape: f32[384,3], index: 0, kind: input, shape index: {}]
  %s1 = inlined_call_operand.vmem [shape: f32[384,8], index: 1, kind: input, shape index: {}]
  %s2 = inlined_call_operand.vmem [shape: f32[8,32], index: 2, kind: input, shape index: {}]
  %s3 = inlined_call_operand.vmem [shape: f32[1,32], index: 3, kind: input, shape index: {}]
  %s4 = inlined_call_operand.vmem [shape: f32[32,32], index: 4, kind: input, shape index: {}]
  %s5 = inlined_call_operand.vmem [shape: f32[1,32], index: 5, kind: input, shape index: {}]
  %s6 = inlined_call_operand.vmem [shape: f32[32,3], index: 6, kind: input, shape index: {}]
  %s7 = inlined_call_operand.vmem [shape: f32[1,3], index: 7, kind: input, shape index: {}]
  %s8 = inlined_call_operand.vmem [shape: f32[1,3], index: 8, kind: input, shape index: {}]
  %s9 = inlined_call_operand.vmem [shape: f32[384,3], index: 9, kind: output, shape index: {0}]
  %s10 = inlined_call_operand.vmem [shape: f32[384,32], index: 10, kind: output, shape index: {1}]
  %s11 = inlined_call_operand.vmem [shape: f32[384,3], index: 11, kind: output, shape index: {2}]
  %12 = xla_tuple %s9, %s10, %s11
  %s13 = sld [smem:[#allocation0]]
  $region62: #{vote_layer_forward.1} parent=0
    _
  %s15 = ssub.s32 1, %s13
  %s16 = scalar_select 0, %s15, %s13
  // Predicated region
  $region2: #{vote_layer_forward.1} parent=0 // pred_check
    _
  $region3: #{vote_layer_forward.1} parent=0 // pred_check_branch
    %18 = sbr.rel (0) target = $region5
  $region4: #{vote_layer_forward.1} parent=0 // pred_region
    _
  $region5: #{vote_layer_forward.1} parent=0 // pred_fallthru
    _
  // Predicated region
  $region6: #{vote_layer_forward.1} parent=0 // pred_check
    _
  $region7: #{vote_layer_forward.1} parent=0 // pred_check_branch
    %20 = sbr.rel (0) target = $region9
  $region8: #{vote_layer_forward.1} parent=0 // pred_region
    _
  $region9: #{vote_layer_forward.1} parent=0 // pred_fallthru
    _
  // Predicated region
  $region10: #{vote_layer_forward.1} parent=0 // pred_check
    _
  $region11: #{vote_layer_forward.1} parent=0 // pred_check_branch
    %22 = sbr.rel (0) target = $region13
  $region12: #{vote_layer_forward.1} parent=0 // pred_region
    _
  $region13: #{vote_layer_forward.1} parent=0 // pred_fallthru
    _
  // Predicated region
  $region14: #{vote_layer_forward.1} parent=0 // pred_check
    _
  $region15: #{vote_layer_forward.1} parent=0 // pred_check_branch
    %24 = sbr.rel (0) target = $region17
  $region16: #{vote_layer_forward.1} parent=0 // pred_region
    _
  $region17: #{vote_layer_forward.1} parent=0 // pred_fallthru
    _
  // Predicated region
  $region18: #{vote_layer_forward.1} parent=0 // pred_check
    _
  $region19: #{vote_layer_forward.1} parent=0 // pred_check_branch
    %26 = sbr.rel (0) target = $region21
  $region20: #{vote_layer_forward.1} parent=0 // pred_region
    _
  $region21: #{vote_layer_forward.1} parent=0 // pred_fallthru
    _
  // Predicated region
  $region22: #{vote_layer_forward.1} parent=0 // pred_check
    _
  $region23: #{vote_layer_forward.1} parent=0 // pred_check_branch
    %28 = sbr.rel (0) target = $region25
  $region24: #{vote_layer_forward.1} parent=0 // pred_region
    _
  $region25: #{vote_layer_forward.1} parent=0 // pred_fallthru
    _
  // Predicated region
  $region26: #{vote_layer_forward.1} parent=0 // pred_check
    _
  $region27: #{vote_layer_forward.1} parent=0 // pred_check_branch
    %30 = sbr.rel (0) target = $region29
  $region28: #{vote_layer_forward.1} parent=0 // pred_region
    _
  $region29: #{vote_layer_forward.1} parent=0 // pred_fallthru
    _
  // Predicated region
  $region30: #{vote_layer_forward.1} parent=0 // pred_check
    _
  $region31: #{vote_layer_forward.1} parent=0 // pred_check_branch
    %32 = sbr.rel (0) target = $region33
  $region32: #{vote_layer_forward.1} parent=0 // pred_region
    _
  $region33: #{vote_layer_forward.1} parent=0 // pred_fallthru
    _
  // Predicated region
  $region34: #{vote_layer_forward.1} parent=0 // pred_check
    _
  $region35: #{vote_layer_forward.1} parent=0 // pred_check_branch
    %34 = sbr.rel (0) target = $region37
  $region36: #{vote_layer_forward.1} parent=0 // pred_region
    _
  $region37: #{vote_layer_forward.1} parent=0 // pred_fallthru
    _
  %v35 = vld [vmem:[%s1] sm:$0xff]
  %v36 = vld [vmem:[%s1 + $0x8] sm:$0xff]
  %v37 = vld [vmem:[%s1 + $0x10] sm:$0xff]
  %v38 = vld [vmem:[%s1 + $0x18] sm:$0xff]
  %v39 = vld [vmem:[%s1 + $0x20] sm:$0xff]
  %v40 = vld [vmem:[%s1 + $0x28] sm:$0xff]
  %v41 = vld [vmem:[%s1 + $0x30] sm:$0xff]
  %v42 = vld [vmem:[%s1 + $0x38] sm:$0xff]
  %v43 = vld [vmem:[%s1 + $0x40] sm:$0xff]
  %v44 = vld [vmem:[%s1 + $0x48] sm:$0xff]
  %v45 = vld [vmem:[%s1 + $0x50] sm:$0xff]
  %v46 = vld [vmem:[%s1 + $0x58] sm:$0xff]
  %v47 = vld [vmem:[%s1 + $0x60] sm:$0xff]
  %v48 = vld [vmem:[%s1 + $0x68] sm:$0xff]
  %v49 = vld [vmem:[%s1 + $0x70] sm:$0xff]
  %v50 = vld [vmem:[%s1 + $0x78] sm:$0xff]
  %v51 = vld [vmem:[%s1 + $0x80] sm:$0xff]
  %v52 = vld [vmem:[%s1 + $0x88] sm:$0xff]
  %v53 = vld [vmem:[%s1 + $0x90] sm:$0xff]
  %v54 = vld [vmem:[%s1 + $0x98] sm:$0xff]
  %v55 = vld [vmem:[%s1 + $0xa0] sm:$0xff]
  %v56 = vld [vmem:[%s1 + $0xa8] sm:$0xff]
  %v57 = vld [vmem:[%s1 + $0xb0] sm:$0xff]
  %v58 = vld [vmem:[%s1 + $0xb8] sm:$0xff]
  %v59 = vld [vmem:[%s1 + $0xc0] sm:$0xff]
  %v60 = vld [vmem:[%s1 + $0xc8] sm:$0xff]
  %v61 = vld [vmem:[%s1 + $0xd0] sm:$0xff]
  %v62 = vld [vmem:[%s1 + $0xd8] sm:$0xff]
  %v63 = vld [vmem:[%s1 + $0xe0] sm:$0xff]
  %v64 = vld [vmem:[%s1 + $0xe8] sm:$0xff]
  %v65 = vld [vmem:[%s1 + $0xf0] sm:$0xff]
  %v66 = vld [vmem:[%s1 + $0xf8] sm:$0xff]
  %v67 = vld [vmem:[%s1 + $0x100] sm:$0xff]
  %v68 = vld [vmem:[%s1 + $0x108] sm:$0xff]
  %v69 = vld [vmem:[%s1 + $0x110] sm:$0xff]
  %v70 = vld [vmem:[%s1 + $0x118] sm:$0xff]
  %v71 = vld [vmem:[%s1 + $0x120] sm:$0xff]
  %v72 = vld [vmem:[%s1 + $0x128] sm:$0xff]
  %v73 = vld [vmem:[%s1 + $0x130] sm:$0xff]
  %v74 = vld [vmem:[%s1 + $0x138] sm:$0xff]
  %v75 = vld [vmem:[%s1 + $0x140] sm:$0xff]
  %v76 = vld [vmem:[%s1 + $0x148] sm:$0xff]
  %v77 = vld [vmem:[%s1 + $0x150] sm:$0xff]
  %v78 = vld [vmem:[%s1 + $0x158] sm:$0xff]
  %v79 = vld [vmem:[%s1 + $0x160] sm:$0xff]
  %v80 = vld [vmem:[%s1 + $0x168] sm:$0xff]
  %v81 = vld [vmem:[%s1 + $0x170] sm:$0xff]
  %v82 = vld [vmem:[%s1 + $0x178] sm:$0xff]
  %v83 = vld [vmem:[%s2] sm:$0xff]
  %v84 = vld [vmem:[%s3] sm:$0x1]
  %v86 = vlaneseq
  %v87 = vshrl.u32 %v86, 7
  %v88 = vsub.s32 0, %v87
  %v89 = vrot.slane %v84, %v88
  %vm91 = vcmask 64512
  %v93 = vsel %vm91, %v35, 0
  %v96 = vsel %vm91, %v36, 0
  %v99 = vsel %vm91, %v37, 0
  %v102 = vsel %vm91, %v38, 0
  %v105 = vsel %vm91, %v39, 0
  %v108 = vsel %vm91, %v40, 0
  %v111 = vsel %vm91, %v41, 0
  %v114 = vsel %vm91, %v42, 0
  %v117 = vsel %vm91, %v43, 0
  %v120 = vsel %vm91, %v44, 0
  %v123 = vsel %vm91, %v45, 0
  %v126 = vsel %vm91, %v46, 0
  %v129 = vsel %vm91, %v47, 0
  %v132 = vsel %vm91, %v48, 0
  %v135 = vsel %vm91, %v49, 0
  %v138 = vsel %vm91, %v50, 0
  %v141 = vsel %vm91, %v51, 0
  %v144 = vsel %vm91, %v52, 0
  %v147 = vsel %vm91, %v53, 0
  %v150 = vsel %vm91, %v54, 0
  %v153 = vsel %vm91, %v55, 0
  %v156 = vsel %vm91, %v56, 0
  %v159 = vsel %vm91, %v57, 0
  %v162 = vsel %vm91, %v58, 0
  %v165 = vsel %vm91, %v59, 0
  %v168 = vsel %vm91, %v60, 0
  %v171 = vsel %vm91, %v61, 0
  %v174 = vsel %vm91, %v62, 0
  %v177 = vsel %vm91, %v63, 0
  %v180 = vsel %vm91, %v64, 0
  %v183 = vsel %vm91, %v65, 0
  %v186 = vsel %vm91, %v66, 0
  %v189 = vsel %vm91, %v67, 0
  %v192 = vsel %vm91, %v68, 0
  %v195 = vsel %vm91, %v69, 0
  %v198 = vsel %vm91, %v70, 0
  %v201 = vsel %vm91, %v71, 0
  %v204 = vsel %vm91, %v72, 0
  %v207 = vsel %vm91, %v73, 0
  %v210 = vsel %vm91, %v74, 0
  %v213 = vsel %vm91, %v75, 0
  %v216 = vsel %vm91, %v76, 0
  %v219 = vsel %vm91, %v77, 0
  %v222 = vsel %vm91, %v78, 0
  %v225 = vsel %vm91, %v79, 0
  %v228 = vsel %vm91, %v80, 0
  %v231 = vsel %vm91, %v81, 0
  %v234 = vsel %vm91, %v82, 0
  %236 = vmatprep.subr.mxu0 0.0
  %237 = vmatpush1.msra.mxu0 %v83
  %238 = vmatprep.subr.mxu0 0.0
  %239 = vmatpush1.msra.mxu0 0.0
  %240 = vmatprep.subr.mxu0 0.0
  %241 = vmatpush1.msra.mxu0 0.0
  %242 = vmatprep.subr.mxu0 0.0
  %243 = vmatpush1.msra.mxu0 0.0
  %244 = vmatprep.subr.mxu0 0.0
  %245 = vmatpush1.msra.mxu0 0.0
  %246 = vmatprep.subr.mxu0 0.0
  %247 = vmatpush1.msra.mxu0 0.0
  %248 = vmatprep.subr.mxu0 0.0
  %249 = vmatpush1.msra.mxu0 0.0
  %250 = vmatprep.subr.mxu0 0.0
  %251 = vmatpush1.msra.mxu0 0.0
  %252 = vmatprep.subr.mxu0 0.0
  %253 = vmatpush1.msra.mxu0 0.0
  %254 = vmatprep.subr.mxu0 0.0
  %255 = vmatpush1.msra.mxu0 0.0
  %256 = vmatprep.subr.mxu0 0.0
  %257 = vmatpush1.msra.mxu0 0.0
  %258 = vmatprep.subr.mxu0 0.0
  %259 = vmatpush1.msra.mxu0 0.0
  %260 = vmatprep.subr.mxu0 0.0
  %261 = vmatpush1.msra.mxu0 0.0
  %262 = vmatprep.subr.mxu0 0.0
  %263 = vmatpush1.msra.mxu0 0.0
  %264 = vmatprep.subr.mxu0 0.0
  %265 = vmatpush1.msra.mxu0 0.0
  %266 = vmatprep.subr.mxu0 0.0
  %267 = vmatpush1.msra.mxu0 0.0
  %268 = vmatprep.subr.mxu0 0.0
  %269 = vmatpush1.msra.mxu0 0.0
  %270 = vmatprep.subr.mxu0 0.0
  %271 = vmatpush1.msra.mxu0 0.0
  %272 = vmatprep.subr.mxu0 0.0
  %273 = vmatpush1.msra.mxu0 0.0
  %274 = vmatprep.subr.mxu0 0.0
  %275 = vmatpush1.msra.mxu0 0.0
  %276 = vmatprep.subr.mxu0 0.0
  %277 = vmatpush1.msra.mxu0 0.0
  %278 = vmatprep.subr.mxu0 0.0
  %279 = vmatpush1.msra.mxu0 0.0
  %280 = vmatprep.subr.mxu0 0.0
  %281 = vmatpush1.msra.mxu0 0.0
  %282 = vmatprep.subr.mxu0 0.0
  %283 = vmatpush1.msra.mxu0 0.0
  %284 = vmatprep.subr.mxu0 0.0
  %285 = vmatpush1.msra.mxu0 0.0
  %286 = vmatprep.subr.mxu0 0.0
  %287 = vmatpush1.msra.mxu0 0.0
  %288 = vmatprep.subr.mxu0 0.0
  %289 = vmatpush1.msra.mxu0 0.0
  %290 = vmatprep.subr.mxu0 0.0
  %291 = vmatpush1.msra.mxu0 0.0
  %292 = vmatprep.subr.mxu0 0.0
  %293 = vmatpush1.msra.mxu0 0.0
  %294 = vmatprep.subr.mxu0 0.0
  %295 = vmatpush1.msra.mxu0 0.0
  %296 = vmatprep.subr.mxu0 0.0
  %297 = vmatpush1.msra.mxu0 0.0
  %298 = vmatprep.subr.mxu0 0.0
  %299 = vmatpush1.msra.mxu0 0.0
  %300 = vmatprep.mubr.f32.mxu0 0.0
  %301 = vmatmul.mubr.f32.gmra.mrb[0].mxu0 %v93
  %v302 = vpop.f32.mrb[0].mxu0
  %v303 = vadd.f32 %v89, %v302
  %v304 = vpop.f32.mrb[0].mxu0
  %305 = vmatprep.mubr.f32.mxu0 0.0
  %306 = vmatmul.mubr.f32.gmra.mrb[0].mxu0 %v96
  %v307 = vpop.f32.mrb[0].mxu0
  %v308 = vadd.f32 %v89, %v307
  %v309 = vpop.f32.mrb[0].mxu0
  %310 = vmatprep.mubr.f32.mxu0 0.0
  %311 = vmatmul.mubr.f32.gmra.mrb[0].mxu0 %v99
  %v312 = vpop.f32.mrb[0].mxu0
  %v313 = vadd.f32 %v89, %v312
  %v314 = vpop.f32.mrb[0].mxu0
  %315 = vmatprep.mubr.f32.mxu0 0.0
  %316 = vmatmul.mubr.f32.gmra.mrb[0].mxu0 %v102
  %v317 = vpop.f32.mrb[0].mxu0
  %v318 = vadd.f32 %v89, %v317
  %v319 = vpop.f32.mrb[0].mxu0
  %320 = vmatprep.mubr.f32.mxu0 0.0
  %321 = vmatmul.mubr.f32.gmra.mrb[0].mxu0 %v105
  %v322 = vpop.f32.mrb[0].mxu0
  %v323 = vadd.f32 %v89, %v322
  %v324 = vpop.f32.mrb[0].mxu0
  %325 = vmatprep.mubr.f32.mxu0 0.0
  %326 = vmatmul.mubr.f32.gmra.mrb[0].mxu0 %v108
  %v327 = vpop.f32.mrb[0].mxu0
  %v328 = vadd.f32 %v89, %v327
  %v329 = vpop.f32.mrb[0].mxu0
  %330 = vmatprep.mubr.f32.mxu0 0.0
  %331 = vmatmul.mubr.f32.gmra.mrb[0].mxu0 %v111
  %v332 = vpop.f32.mrb[0].mxu0
  %v333 = vadd.f32 %v89, %v332
  %v334 = vpop.f32.mrb[0].mxu0
  %335 = vmatprep.mubr.f32.mxu0 0.0
  %336 = vmatmul.mubr.f32.gmra.mrb[0].mxu0 %v114
  %v337 = vpop.f32.mrb[0].mxu0
  %v338 = vadd.f32 %v89, %v337
  %v339 = vpop.f32.mrb[0].mxu0
  %340 = vmatprep.mubr.f32.mxu0 0.0
  %341 = vmatmul.mubr.f32.gmra.mrb[0].mxu0 %v117
  %v342 = vpop.f32.mrb[0].mxu0
  %v343 = vadd.f32 %v89, %v342
  %v344 = vpop.f32.mrb[0].mxu0
  %345 = vmatprep.mubr.f32.mxu0 0.0
  %346 = vmatmul.mubr.f32.gmra.mrb[0].mxu0 %v120
  %v347 = vpop.f32.mrb[0].mxu0
  %v348 = vadd.f32 %v89, %v347
  %v349 = vpop.f32.mrb[0].mxu0
  %350 = vmatprep.mubr.f32.mxu0 0.0
  %351 = vmatmul.mubr.f32.gmra.mrb[0].mxu0 %v123
  %v352 = vpop.f32.mrb[0].mxu0
  %v353 = vadd.f32 %v89, %v352
  %v354 = vpop.f32.mrb[0].mxu0
  %355 = vmatprep.mubr.f32.mxu0 0.0
  %356 = vmatmul.mubr.f32.gmra.mrb[0].mxu0 %v126
  %v357 = vpop.f32.mrb[0].mxu0
  %v358 = vadd.f32 %v89, %v357
  %v359 = vpop.f32.mrb[0].mxu0
  %360 = vmatprep.mubr.f32.mxu0 0.0
  %361 = vmatmul.mubr.f32.gmra.mrb[0].mxu0 %v129
  %v362 = vpop.f32.mrb[0].mxu0
  %v363 = vadd.f32 %v89, %v362
  %v364 = vpop.f32.mrb[0].mxu0
  %365 = vmatprep.mubr.f32.mxu0 0.0
  %366 = vmatmul.mubr.f32.gmra.mrb[0].mxu0 %v132
  %v367 = vpop.f32.mrb[0].mxu0
  %v368 = vadd.f32 %v89, %v367
  %v369 = vpop.f32.mrb[0].mxu0
  %370 = vmatprep.mubr.f32.mxu0 0.0
  %371 = vmatmul.mubr.f32.gmra.mrb[0].mxu0 %v135
  %v372 = vpop.f32.mrb[0].mxu0
  %v373 = vadd.f32 %v89, %v372
  %v374 = vpop.f32.mrb[0].mxu0
  %375 = vmatprep.mubr.f32.mxu0 0.0
  %376 = vmatmul.mubr.f32.gmra.mrb[0].mxu0 %v138
  %v377 = vpop.f32.mrb[0].mxu0
  %v378 = vadd.f32 %v89, %v377
  %v379 = vpop.f32.mrb[0].mxu0
  %380 = vmatprep.mubr.f32.mxu0 0.0
  %381 = vmatmul.mubr.f32.gmra.mrb[0].mxu0 %v141
  %v382 = vpop.f32.mrb[0].mxu0
  %v383 = vadd.f32 %v89, %v382
  %v384 = vpop.f32.mrb[0].mxu0
  %385 = vmatprep.mubr.f32.mxu0 0.0
  %386 = vmatmul.mubr.f32.gmra.mrb[0].mxu0 %v144
  %v387 = vpop.f32.mrb[0].mxu0
  %v388 = vadd.f32 %v89, %v387
  %v389 = vpop.f32.mrb[0].mxu0
  %390 = vmatprep.mubr.f32.mxu0 0.0
  %391 = vmatmul.mubr.f32.gmra.mrb[0].mxu0 %v147
  %v392 = vpop.f32.mrb[0].mxu0
  %v393 = vadd.f32 %v89, %v392
  %v394 = vpop.f32.mrb[0].mxu0
  %395 = vmatprep.mubr.f32.mxu0 0.0
  %396 = vmatmul.mubr.f32.gmra.mrb[0].mxu0 %v150
  %v397 = vpop.f32.mrb[0].mxu0
  %v398 = vadd.f32 %v89, %v397
  %v399 = vpop.f32.mrb[0].mxu0
  %400 = vmatprep.mubr.f32.mxu0 0.0
  %401 = vmatmul.mubr.f32.gmra.mrb[0].mxu0 %v153
  %v402 = vpop.f32.mrb[0].mxu0
  %v403 = vadd.f32 %v89, %v402
  %v404 = vpop.f32.mrb[0].mxu0
  %405 = vmatprep.mubr.f32.mxu0 0.0
  %406 = vmatmul.mubr.f32.gmra.mrb[0].mxu0 %v156
  %v407 = vpop.f32.mrb[0].mxu0
  %v408 = vadd.f32 %v89, %v407
  %v409 = vpop.f32.mrb[0].mxu0
  %410 = vmatprep.mubr.f32.mxu0 0.0
  %411 = vmatmul.mubr.f32.gmra.mrb[0].mxu0 %v159
  %v412 = vpop.f32.mrb[0].mxu0
  %v413 = vadd.f32 %v89, %v412
  %v414 = vpop.f32.mrb[0].mxu0
  %415 = vmatprep.mubr.f32.mxu0 0.0
  %416 = vmatmul.mubr.f32.gmra.mrb[0].mxu0 %v162
  %v417 = vpop.f32.mrb[0].mxu0
  %v418 = vadd.f32 %v89, %v417
  %v419 = vpop.f32.mrb[0].mxu0
  %420 = vmatprep.mubr.f32.mxu0 0.0
  %421 = vmatmul.mubr.f32.gmra.mrb[0].mxu0 %v165
  %v422 = vpop.f32.mrb[0].mxu0
  %v423 = vadd.f32 %v89, %v422
  %v424 = vpop.f32.mrb[0].mxu0
  %425 = vmatprep.mubr.f32.mxu0 0.0
  %426 = vmatmul.mubr.f32.gmra.mrb[0].mxu0 %v168
  %v427 = vpop.f32.mrb[0].mxu0
  %v428 = vadd.f32 %v89, %v427
  %v429 = vpop.f32.mrb[0].mxu0
  %430 = vmatprep.mubr.f32.mxu0 0.0
  %431 = vmatmul.mubr.f32.gmra.mrb[0].mxu0 %v171
  %v432 = vpop.f32.mrb[0].mxu0
  %v433 = vadd.f32 %v89, %v432
  %v434 = vpop.f32.mrb[0].mxu0
  %435 = vmatprep.mubr.f32.mxu0 0.0
  %436 = vmatmul.mubr.f32.gmra.mrb[0].mxu0 %v174
  %v437 = vpop.f32.mrb[0].mxu0
  %v438 = vadd.f32 %v89, %v437
  %v439 = vpop.f32.mrb[0].mxu0
  %440 = vmatprep.mubr.f32.mxu0 0.0
  %441 = vmatmul.mubr.f32.gmra.mrb[0].mxu0 %v177
  %v442 = vpop.f32.mrb[0].mxu0
  %v443 = vadd.f32 %v89, %v442
  %v444 = vpop.f32.mrb[0].mxu0
  %445 = vmatprep.mubr.f32.mxu0 0.0
  %446 = vmatmul.mubr.f32.gmra.mrb[0].mxu0 %v180
  %v447 = vpop.f32.mrb[0].mxu0
  %v448 = vadd.f32 %v89, %v447
  %v449 = vpop.f32.mrb[0].mxu0
  %450 = vmatprep.mubr.f32.mxu0 0.0
  %451 = vmatmul.mubr.f32.gmra.mrb[0].mxu0 %v183
  %v452 = vpop.f32.mrb[0].mxu0
  %v453 = vadd.f32 %v89, %v452
  %v454 = vpop.f32.mrb[0].mxu0
  %455 = vmatprep.mubr.f32.mxu0 0.0
  %456 = vmatmul.mubr.f32.gmra.mrb[0].mxu0 %v186
  %v457 = vpop.f32.mrb[0].mxu0
  %v458 = vadd.f32 %v89, %v457
  %v459 = vpop.f32.mrb[0].mxu0
  %460 = vmatprep.mubr.f32.mxu0 0.0
  %461 = vmatmul.mubr.f32.gmra.mrb[0].mxu0 %v189
  %v462 = vpop.f32.mrb[0].mxu0
  %v463 = vadd.f32 %v89, %v462
  %v464 = vpop.f32.mrb[0].mxu0
  %465 = vmatprep.mubr.f32.mxu0 0.0
  %466 = vmatmul.mubr.f32.gmra.mrb[0].mxu0 %v192
  %v467 = vpop.f32.mrb[0].mxu0
  %v468 = vadd.f32 %v89, %v467
  %v469 = vpop.f32.mrb[0].mxu0
  %470 = vmatprep.mubr.f32.mxu0 0.0
  %471 = vmatmul.mubr.f32.gmra.mrb[0].mxu0 %v195
  %v472 = vpop.f32.mrb[0].mxu0
  %v473 = vadd.f32 %v89, %v472
  %v474 = vpop.f32.mrb[0].mxu0
  %475 = vmatprep.mubr.f32.mxu0 0.0
  %476 = vmatmul.mubr.f32.gmra.mrb[0].mxu0 %v198
  %v477 = vpop.f32.mrb[0].mxu0
  %v478 = vadd.f32 %v89, %v477
  %v479 = vpop.f32.mrb[0].mxu0
  %480 = vmatprep.mubr.f32.mxu0 0.0
  %481 = vmatmul.mubr.f32.gmra.mrb[0].mxu0 %v201
  %v482 = vpop.f32.mrb[0].mxu0
  %v483 = vadd.f32 %v89, %v482
  %v484 = vpop.f32.mrb[0].mxu0
  %485 = vmatprep.mubr.f32.mxu0 0.0
  %486 = vmatmul.mubr.f32.gmra.mrb[0].mxu0 %v204
  %v487 = vpop.f32.mrb[0].mxu0
  %v488 = vadd.f32 %v89, %v487
  %v489 = vpop.f32.mrb[0].mxu0
  %490 = vmatprep.mubr.f32.mxu0 0.0
  %491 = vmatmul.mubr.f32.gmra.mrb[0].mxu0 %v207
  %v492 = vpop.f32.mrb[0].mxu0
  %v493 = vadd.f32 %v89, %v492
  %v494 = vpop.f32.mrb[0].mxu0
  %495 = vmatprep.mubr.f32.mxu0 0.0
  %496 = vmatmul.mubr.f32.gmra.mrb[0].mxu0 %v210
  %v497 = vpop.f32.mrb[0].mxu0
  %v498 = vadd.f32 %v89, %v497
  %v499 = vpop.f32.mrb[0].mxu0
  %500 = vmatprep.mubr.f32.mxu0 0.0
  %501 = vmatmul.mubr.f32.gmra.mrb[0].mxu0 %v213
  %v502 = vpop.f32.mrb[0].mxu0
  %v503 = vadd.f32 %v89, %v502
  %v504 = vpop.f32.mrb[0].mxu0
  %505 = vmatprep.mubr.f32.mxu0 0.0
  %506 = vmatmul.mubr.f32.gmra.mrb[0].mxu0 %v216
  %v507 = vpop.f32.mrb[0].mxu0
  %v508 = vadd.f32 %v89, %v507
  %v509 = vpop.f32.mrb[0].mxu0
  %510 = vmatprep.mubr.f32.mxu0 0.0
  %511 = vmatmul.mubr.f32.gmra.mrb[0].mxu0 %v219
  %v512 = vpop.f32.mrb[0].mxu0
  %v513 = vadd.f32 %v89, %v512
  %v514 = vpop.f32.mrb[0].mxu0
  %515 = vmatprep.mubr.f32.mxu0 0.0
  %516 = vmatmul.mubr.f32.gmra.mrb[0].mxu0 %v222
  %v517 = vpop.f32.mrb[0].mxu0
  %v518 = vadd.f32 %v89, %v517
  %v519 = vpop.f32.mrb[0].mxu0
  %520 = vmatprep.mubr.f32.mxu0 0.0
  %521 = vmatmul.mubr.f32.gmra.mrb[0].mxu0 %v225
  %v522 = vpop.f32.mrb[0].mxu0
  %v523 = vadd.f32 %v89, %v522
  %v524 = vpop.f32.mrb[0].mxu0
  %525 = vmatprep.mubr.f32.mxu0 0.0
  %526 = vmatmul.mubr.f32.gmra.mrb[0].mxu0 %v228
  %v527 = vpop.f32.mrb[0].mxu0
  %v528 = vadd.f32 %v89, %v527
  %v529 = vpop.f32.mrb[0].mxu0
  %530 = vmatprep.mubr.f32.mxu0 0.0
  %531 = vmatmul.mubr.f32.gmra.mrb[0].mxu0 %v231
  %v532 = vpop.f32.mrb[0].mxu0
  %v533 = vadd.f32 %v89, %v532
  %v534 = vpop.f32.mrb[0].mxu0
  %535 = vmatprep.mubr.f32.mxu0 0.0
  %536 = vmatmul.mubr.f32.gmra.mrb[0].mxu0 %v234
  %v537 = vpop.f32.mrb[0].mxu0
  %v538 = vadd.f32 %v89, %v537
  %v539 = vpop.f32.mrb[0].mxu0
  %540 = vdwg.mxu0
  %v541 = vmax.f32 %v303, 0.0
  %v542 = vmax.f32 %v308, 0.0
  %v543 = vmax.f32 %v313, 0.0
  %v544 = vmax.f32 %v318, 0.0
  %v545 = vmax.f32 %v323, 0.0
  %v546 = vmax.f32 %v328, 0.0
  %v547 = vmax.f32 %v333, 0.0
  %v548 = vmax.f32 %v338, 0.0
  %v549 = vmax.f32 %v343, 0.0
  %v550 = vmax.f32 %v348, 0.0
  %v551 = vmax.f32 %v353, 0.0
  %v552 = vmax.f32 %v358, 0.0
  %v553 = vmax.f32 %v363, 0.0
  %v554 = vmax.f32 %v368, 0.0
  %v555 = vmax.f32 %v373, 0.0
  %v556 = vmax.f32 %v378, 0.0
  %v557 = vmax.f32 %v383, 0.0
  %v558 = vmax.f32 %v388, 0.0
  %v559 = vmax.f32 %v393, 0.0
  %v560 = vmax.f32 %v398, 0.0
  %v561 = vmax.f32 %v403, 0.0
  %v562 = vmax.f32 %v408, 0.0
  %v563 = vmax.f32 %v413, 0.0
  %v564 = vmax.f32 %v418, 0.0
  %v565 = vmax.f32 %v423, 0.0
  %v566 = vmax.f32 %v428, 0.0
  %v567 = vmax.f32 %v433, 0.0
  %v568 = vmax.f32 %v438, 0.0
  %v569 = vmax.f32 %v443, 0.0
  %v570 = vmax.f32 %v448, 0.0
  %v571 = vmax.f32 %v453, 0.0
  %v572 = vmax.f32 %v458, 0.0
  %v573 = vmax.f32 %v463, 0.0
  %v574 = vmax.f32 %v468, 0.0
  %v575 = vmax.f32 %v473, 0.0
  %v576 = vmax.f32 %v478, 0.0
  %v577 = vmax.f32 %v483, 0.0
  %v578 = vmax.f32 %v488, 0.0
  %v579 = vmax.f32 %v493, 0.0
  %v580 = vmax.f32 %v498, 0.0
  %v581 = vmax.f32 %v503, 0.0
  %v582 = vmax.f32 %v508, 0.0
  %v583 = vmax.f32 %v513, 0.0
  %v584 = vmax.f32 %v518, 0.0
  %v585 = vmax.f32 %v523, 0.0
  %v586 = vmax.f32 %v528, 0.0
  %v587 = vmax.f32 %v533, 0.0
  %v588 = vmax.f32 %v538, 0.0
  %vm589 = vcmask 261120
  %v590 = vsel %vm589, %v541, 0.0
  %v591 = vsel %vm589, %v542, 0.0
  %v592 = vadd.f32 %v590, %v591
  %v593 = vsel %vm589, %v543, 0.0
  %v594 = vadd.f32 %v592, %v593
  %v595 = vsel %vm589, %v544, 0.0
  %v596 = vadd.f32 %v594, %v595
  %v597 = vsel %vm589, %v545, 0.0
  %v598 = vadd.f32 %v596, %v597
  %v599 = vsel %vm589, %v546, 0.0
  %v600 = vadd.f32 %v598, %v599
  %v601 = vsel %vm589, %v547, 0.0
  %v602 = vadd.f32 %v600, %v601
  %v603 = vsel %vm589, %v548, 0.0
  %v604 = vadd.f32 %v602, %v603
  %v605 = vsel %vm589, %v549, 0.0
  %v606 = vadd.f32 %v604, %v605
  %v607 = vsel %vm589, %v550, 0.0
  %v608 = vadd.f32 %v606, %v607
  %v609 = vsel %vm589, %v551, 0.0
  %v610 = vadd.f32 %v608, %v609
  %v611 = vsel %vm589, %v552, 0.0
  %v612 = vadd.f32 %v610, %v611
  %v613 = vsel %vm589, %v553, 0.0
  %v614 = vadd.f32 %v612, %v613
  %v615 = vsel %vm589, %v554, 0.0
  %v616 = vadd.f32 %v614, %v615
  %v617 = vsel %vm589, %v555, 0.0
  %v618 = vadd.f32 %v616, %v617
  %v619 = vsel %vm589, %v556, 0.0
  %v620 = vadd.f32 %v618, %v619
  %v621 = vsel %vm589, %v557, 0.0
  %v622 = vadd.f32 %v620, %v621
  %v623 = vsel %vm589, %v558, 0.0
  %v624 = vadd.f32 %v622, %v623
  %v625 = vsel %vm589, %v559, 0.0
  %v626 = vadd.f32 %v624, %v625
  %v627 = vsel %vm589, %v560, 0.0
  %v628 = vadd.f32 %v626, %v627
  %v629 = vsel %vm589, %v561, 0.0
  %v630 = vadd.f32 %v628, %v629
  %v631 = vsel %vm589, %v562, 0.0
  %v632 = vadd.f32 %v630, %v631
  %v633 = vsel %vm589, %v563, 0.0
  %v634 = vadd.f32 %v632, %v633
  %v635 = vsel %vm589, %v564, 0.0
  %v636 = vadd.f32 %v634, %v635
  %v637 = vsel %vm589, %v565, 0.0
  %v638 = vadd.f32 %v636, %v637
  %v639 = vsel %vm589, %v566, 0.0
  %v640 = vadd.f32 %v638, %v639
  %v641 = vsel %vm589, %v567, 0.0
  %v642 = vadd.f32 %v640, %v641
  %v643 = vsel %vm589, %v568, 0.0
  %v644 = vadd.f32 %v642, %v643
  %v645 = vsel %vm589, %v569, 0.0
  %v646 = vadd.f32 %v644, %v645
  %v647 = vsel %vm589, %v570, 0.0
  %v648 = vadd.f32 %v646, %v647
  %v649 = vsel %vm589, %v571, 0.0
  %v650 = vadd.f32 %v648, %v649
  %v651 = vsel %vm589, %v572, 0.0
  %v652 = vadd.f32 %v650, %v651
  %v653 = vsel %vm589, %v573, 0.0
  %v654 = vadd.f32 %v652, %v653
  %v655 = vsel %vm589, %v574, 0.0
  %v656 = vadd.f32 %v654, %v655
  %v657 = vsel %vm589, %v575, 0.0
  %v658 = vadd.f32 %v656, %v657
  %v659 = vsel %vm589, %v576, 0.0
  %v660 = vadd.f32 %v658, %v659
  %v661 = vsel %vm589, %v577, 0.0
  %v662 = vadd.f32 %v660, %v661
  %v663 = vsel %vm589, %v578, 0.0
  %v664 = vadd.f32 %v662, %v663
  %v665 = vsel %vm589, %v579, 0.0
  %v666 = vadd.f32 %v664, %v665
  %v667 = vsel %vm589, %v580, 0.0
  %v668 = vadd.f32 %v666, %v667
  %v669 = vsel %vm589, %v581, 0.0
  %v670 = vadd.f32 %v668, %v669
  %v671 = vsel %vm589, %v582, 0.0
  %v672 = vadd.f32 %v670, %v671
  %v673 = vsel %vm589, %v583, 0.0
  %v674 = vadd.f32 %v672, %v673
  %v675 = vsel %vm589, %v584, 0.0
  %v676 = vadd.f32 %v674, %v675
  %v677 = vsel %vm589, %v585, 0.0
  %v678 = vadd.f32 %v676, %v677
  %v679 = vsel %vm589, %v586, 0.0
  %v680 = vadd.f32 %v678, %v679
  %v681 = vsel %vm589, %v587, 0.0
  %v682 = vadd.f32 %v680, %v681
  %v683 = vsel %vm589, %v588, 0.0
  %v684 = vadd.f32 %v682, %v683
  %v685 = vrot.slane %v684, 4
  %v686 = vadd.f32 %v684, %v685
  %v687 = vrot.slane %v686, 2
  %v688 = vadd.f32 %v686, %v687
  %v689 = vrot.slane %v688, 1
  %v690 = vadd.f32 %v688, %v689
  %v691 = vrcp.pop 384.0
  %v692 = vmul.f32 %v690, %v691
  %v693 = vsub.f32 %v541, %v692
  %v694 = vsub.f32 %v542, %v692
  %v695 = vsub.f32 %v543, %v692
  %v696 = vsub.f32 %v544, %v692
  %v697 = vsub.f32 %v545, %v692
  %v698 = vsub.f32 %v546, %v692
  %v699 = vsub.f32 %v547, %v692
  %v700 = vsub.f32 %v548, %v692
  %v701 = vsub.f32 %v549, %v692
  %v702 = vsub.f32 %v550, %v692
  %v703 = vsub.f32 %v551, %v692
  %v704 = vsub.f32 %v552, %v692
  %v705 = vsub.f32 %v553, %v692
  %v706 = vsub.f32 %v554, %v692
  %v707 = vsub.f32 %v555, %v692
  %v708 = vsub.f32 %v556, %v692
  %v709 = vsub.f32 %v557, %v692
  %v710 = vsub.f32 %v558, %v692
  %v711 = vsub.f32 %v559, %v692
  %v712 = vsub.f32 %v560, %v692
  %v713 = vsub.f32 %v561, %v692
  %v714 = vsub.f32 %v562, %v692
  %v715 = vsub.f32 %v563, %v692
  %v716 = vsub.f32 %v564, %v692
  %v717 = vsub.f32 %v565, %v692
  %v718 = vsub.f32 %v566, %v692
  %v719 = vsub.f32 %v567, %v692
  %v720 = vsub.f32 %v568, %v692
  %v721 = vsub.f32 %v569, %v692
  %v722 = vsub.f32 %v570, %v692
  %v723 = vsub.f32 %v571, %v692
  %v724 = vsub.f32 %v572, %v692
  %v725 = vsub.f32 %v573, %v692
  %v726 = vsub.f32 %v574, %v692
  %v727 = vsub.f32 %v575, %v692
  %v728 = vsub.f32 %v576, %v692
  %v729 = vsub.f32 %v577, %v692
  %v730 = vsub.f32 %v578, %v692
  %v731 = vsub.f32 %v579, %v692
  %v732 = vsub.f32 %v580, %v692
  %v733 = vsub.f32 %v581, %v692
  %v734 = vsub.f32 %v582, %v692
  %v735 = vsub.f32 %v583, %v692
  %v736 = vsub.f32 %v584, %v692
  %v737 = vsub.f32 %v585, %v692
  %v738 = vsub.f32 %v586, %v692
  %v739 = vsub.f32 %v587, %v692
  %v740 = vsub.f32 %v588, %v692
  %v741 = vmul.f32 %v693, %v693
  %v742 = vmul.f32 %v694, %v694
  %v743 = vmul.f32 %v695, %v695
  %v744 = vmul.f32 %v696, %v696
  %v745 = vmul.f32 %v697, %v697
  %v746 = vmul.f32 %v698, %v698
  %v747 = vmul.f32 %v699, %v699
  %v748 = vmul.f32 %v700, %v700
  %v749 = vmul.f32 %v701, %v701
  %v750 = vmul.f32 %v702, %v702
  %v751 = vmul.f32 %v703, %v703
  %v752 = vmul.f32 %v704, %v704
  %v753 = vmul.f32 %v705, %v705
  %v754 = vmul.f32 %v706, %v706
  %v755 = vmul.f32 %v707, %v707
  %v756 = vmul.f32 %v708, %v708
  %v757 = vmul.f32 %v709, %v709
  %v758 = vmul.f32 %v710, %v710
  %v759 = vmul.f32 %v711, %v711
  %v760 = vmul.f32 %v712, %v712
  %v761 = vmul.f32 %v713, %v713
  %v762 = vmul.f32 %v714, %v714
  %v763 = vmul.f32 %v715, %v715
  %v764 = vmul.f32 %v716, %v716
  %v765 = vmul.f32 %v717, %v717
  %v766 = vmul.f32 %v718, %v718
  %v767 = vmul.f32 %v719, %v719
  %v768 = vmul.f32 %v720, %v720
  %v769 = vmul.f32 %v721, %v721
  %v770 = vmul.f32 %v722, %v722
  %v771 = vmul.f32 %v723, %v723
  %v772 = vmul.f32 %v724, %v724
  %v773 = vmul.f32 %v725, %v725
  %v774 = vmul.f32 %v726, %v726
  %v775 = vmul.f32 %v727, %v727
  %v776 = vmul.f32 %v728, %v728
  %v777 = vmul.f32 %v729, %v729
  %v778 = vmul.f32 %v730, %v730
  %v779 = vmul.f32 %v731, %v731
  %v780 = vmul.f32 %v732, %v732
  %v781 = vmul.f32 %v733, %v733
  %v782 = vmul.f32 %v734, %v734
  %v783 = vmul.f32 %v735, %v735
  %v784 = vmul.f32 %v736, %v736
  %v785 = vmul.f32 %v737, %v737
  %v786 = vmul.f32 %v738, %v738
  %v787 = vmul.f32 %v739, %v739
  %v788 = vmul.f32 %v740, %v740
  %v789 = vsel %vm589, %v741, 0.0
  %v790 = vsel %vm589, %v742, 0.0
  %v791 = vadd.f32 %v789, %v790
  %v792 = vsel %vm589, %v743, 0.0
  %v793 = vadd.f32 %v791, %v792
  %v794 = vsel %vm589, %v744, 0.0
  %v795 = vadd.f32 %v793, %v794
  %v796 = vsel %vm589, %v745, 0.0
  %v797 = vadd.f32 %v795, %v796
  %v798 = vsel %vm589, %v746, 0.0
  %v799 = vadd.f32 %v797, %v798
  %v800 = vsel %vm589, %v747, 0.0
  %v801 = vadd.f32 %v799, %v800
  %v802 = vsel %vm589, %v748, 0.0
  %v803 = vadd.f32 %v801, %v802
  %v804 = vsel %vm589, %v749, 0.0
  %v805 = vadd.f32 %v803, %v804
  %v806 = vsel %vm589, %v750, 0.0
  %v807 = vadd.f32 %v805, %v806
  %v808 = vsel %vm589, %v751, 0.0
  %v809 = vadd.f32 %v807, %v808
  %v810 = vsel %vm589, %v752, 0.0
  %v811 = vadd.f32 %v809, %v810
  %v812 = vsel %vm589, %v753, 0.0
  %v813 = vadd.f32 %v811, %v812
  %v814 = vsel %vm589, %v754, 0.0
  %v815 = vadd.f32 %v813, %v814
  %v816 = vsel %vm589, %v755, 0.0
  %v817 = vadd.f32 %v815, %v816
  %v818 = vsel %vm589, %v756, 0.0
  %v819 = vadd.f32 %v817, %v818
  %v820 = vsel %vm589, %v757, 0.0
  %v821 = vadd.f32 %v819, %v820
  %v822 = vsel %vm589, %v758, 0.0
  %v823 = vadd.f32 %v821, %v822
  %v824 = vsel %vm589, %v759, 0.0
  %v825 = vadd.f32 %v823, %v824
  %v826 = vsel %vm589, %v760, 0.0
  %v827 = vadd.f32 %v825, %v826
  %v828 = vsel %vm589, %v761, 0.0
  %v829 = vadd.f32 %v827, %v828
  %v830 = vsel %vm589, %v762, 0.0
  %v831 = vadd.f32 %v829, %v830
  %v832 = vsel %vm589, %v763, 0.0
  %v833 = vadd.f32 %v831, %v832
  %v834 = vsel %vm589, %v764, 0.0
  %v835 = vadd.f32 %v833, %v834
  %v836 = vsel %vm589, %v765, 0.0
  %v837 = vadd.f32 %v835, %v836
  %v838 = vsel %vm589, %v766, 0.0
  %v839 = vadd.f32 %v837, %v838
  %v840 = vsel %vm589, %v767, 0.0
  %v841 = vadd.f32 %v839, %v840
  %v842 = vsel %vm589, %v768, 0.0
  %v843 = vadd.f32 %v841, %v842
  %v844 = vsel %vm589, %v769, 0.0
  %v845 = vadd.f32 %v843, %v844
  %v846 = vsel %vm589, %v770, 0.0
  %v847 = vadd.f32 %v845, %v846
  %v848 = vsel %vm589, %v771, 0.0
  %v849 = vadd.f32 %v847, %v848
  %v850 = vsel %vm589, %v772, 0.0
  %v851 = vadd.f32 %v849, %v850
  %v852 = vsel %vm589, %v773, 0.0
  %v853 = vadd.f32 %v851, %v852
  %v854 = vsel %vm589, %v774, 0.0
  %v855 = vadd.f32 %v853, %v854
  %v856 = vsel %vm589, %v775, 0.0
  %v857 = vadd.f32 %v855, %v856
  %v858 = vsel %vm589, %v776, 0.0
  %v859 = vadd.f32 %v857, %v858
  %v860 = vsel %vm589, %v777, 0.0
  %v861 = vadd.f32 %v859, %v860
  %v862 = vsel %vm589, %v778, 0.0
  %v863 = vadd.f32 %v861, %v862
  %v864 = vsel %vm589, %v779, 0.0
  %v865 = vadd.f32 %v863, %v864
  %v866 = vsel %vm589, %v780, 0.0
  %v867 = vadd.f32 %v865, %v866
  %v868 = vsel %vm589, %v781, 0.0
  %v869 = vadd.f32 %v867, %v868
  %v870 = vsel %vm589, %v782, 0.0
  %v871 = vadd.f32 %v869, %v870
  %v872 = vsel %vm589, %v783, 0.0
  %v873 = vadd.f32 %v871, %v872
  %v874 = vsel %vm589, %v784, 0.0
  %v875 = vadd.f32 %v873, %v874
  %v876 = vsel %vm589, %v785, 0.0
  %v877 = vadd.f32 %v875, %v876
  %v878 = vsel %vm589, %v786, 0.0
  %v879 = vadd.f32 %v877, %v878
  %v880 = vsel %vm589, %v787, 0.0
  %v881 = vadd.f32 %v879, %v880
  %v882 = vsel %vm589, %v788, 0.0
  %v883 = vadd.f32 %v881, %v882
  %v884 = vrot.slane %v883, 4
  %v885 = vadd.f32 %v883, %v884
  %v886 = vrot.slane %v885, 2
  %v887 = vadd.f32 %v885, %v886
  %v888 = vrot.slane %v887, 1
  %v889 = vadd.f32 %v887, %v888
  %v890 = vmul.f32 %v889, %v691
  %v891 = vadd.f32 %v890, 0.001
  %v892 = vrsqrt.pop %v891
  %v893 = vmul.f32 %v693, %v892
  %v894 = vmul.f32 %v694, %v892
  %v895 = vmul.f32 %v695, %v892
  %v896 = vmul.f32 %v696, %v892
  %v897 = vmul.f32 %v697, %v892
  %v898 = vmul.f32 %v698, %v892
  %v899 = vmul.f32 %v699, %v892
  %v900 = vmul.f32 %v700, %v892
  %v901 = vmul.f32 %v701, %v892
  %v902 = vmul.f32 %v702, %v892
  %v903 = vmul.f32 %v703, %v892
  %v904 = vmul.f32 %v704, %v892
  %v905 = vmul.f32 %v705, %v892
  %v906 = vmul.f32 %v706, %v892
  %v907 = vmul.f32 %v707, %v892
  %v908 = vmul.f32 %v708, %v892
  %v909 = vmul.f32 %v709, %v892
  %v910 = vmul.f32 %v710, %v892
  %v911 = vmul.f32 %v711, %v892
  %v912 = vmul.f32 %v712, %v892
  %v913 = vmul.f32 %v713, %v892
  %v914 = vmul.f32 %v714, %v892
  %v915 = vmul.f32 %v715, %v892
  %v916 = vmul.f32 %v716, %v892
  %v917 = vmul.f32 %v717, %v892
  %v918 = vmul.f32 %v718, %v892
  %v919 = vmul.f32 %v719, %v892
  %v920 = vmul.f32 %v720, %v892
  %v921 = vmul.f32 %v721, %v892
  %v922 = vmul.f32 %v722, %v892
  %v923 = vmul.f32 %v723, %v892
  %v924 = vmul.f32 %v724, %v892
  %v925 = vmul.f32 %v725, %v892
  %v926 = vmul.f32 %v726, %v892
  %v927 = vmul.f32 %v727, %v892
  %v928 = vmul.f32 %v728, %v892
  %v929 = vmul.f32 %v729, %v892
  %v930 = vmul.f32 %v730, %v892
  %v931 = vmul.f32 %v731, %v892
  %v932 = vmul.f32 %v732, %v892
  %v933 = vmul.f32 %v733, %v892
  %v934 = vmul.f32 %v734, %v892
  %v935 = vmul.f32 %v735, %v892
  %v936 = vmul.f32 %v736, %v892
  %v937 = vmul.f32 %v737, %v892
  %v938 = vmul.f32 %v738, %v892
  %v939 = vmul.f32 %v739, %v892
  %v940 = vmul.f32 %v740, %v892
  %v941 = vld [vmem:[%s4] sm:$0xff]
  %v942 = vld [vmem:[%s4 + $0x8] sm:$0xff]
  %v943 = vld [vmem:[%s4 + $0x10] sm:$0xff]
  %v944 = vld [vmem:[%s4 + $0x18] sm:$0xff]
  %v945 = vld [vmem:[%s5] sm:$0x1]
  %v947 = vlaneseq
  %v948 = vshrl.u32 %v947, 7
  %v949 = vsub.s32 0, %v948
  %v950 = vrot.slane %v945, %v949
  %v953 = vsel %vm589, %v893, 0
  %v956 = vsel %vm589, %v894, 0
  %v959 = vsel %vm589, %v895, 0
  %v962 = vsel %vm589, %v896, 0
  %v965 = vsel %vm589, %v897, 0
  %v968 = vsel %vm589, %v898, 0
  %v971 = vsel %vm589, %v899, 0
  %v974 = vsel %vm589, %v900, 0
  %v977 = vsel %vm589, %v901, 0
  %v980 = vsel %vm589, %v902, 0
  %v983 = vsel %vm589, %v903, 0
  %v986 = vsel %vm589, %v904, 0
  %v989 = vsel %vm589, %v905, 0
  %v992 = vsel %vm589, %v906, 0
  %v995 = vsel %vm589, %v907, 0
  %v998 = vsel %vm589, %v908, 0
  %v1001 = vsel %vm589, %v909, 0
  %v1004 = vsel %vm589, %v910, 0
  %v1007 = vsel %vm589, %v911, 0
  %v1010 = vsel %vm589, %v912, 0
  %v1013 = vsel %vm589, %v913, 0
  %v1016 = vsel %vm589, %v914, 0
  %v1019 = vsel %vm589, %v915, 0
  %v1022 = vsel %vm589, %v916, 0
  %v1025 = vsel %vm589, %v917, 0
  %v1028 = vsel %vm589, %v918, 0
  %v1031 = vsel %vm589, %v919, 0
  %v1034 = vsel %vm589, %v920, 0
  %v1037 = vsel %vm589, %v921, 0
  %v1040 = vsel %vm589, %v922, 0
  %v1043 = vsel %vm589, %v923, 0
  %v1046 = vsel %vm589, %v924, 0
  %v1049 = vsel %vm589, %v925, 0
  %v1052 = vsel %vm589, %v926, 0
  %v1055 = vsel %vm589, %v927, 0
  %v1058 = vsel %vm589, %v928, 0
  %v1061 = vsel %vm589, %v929, 0
  %v1064 = vsel %vm589, %v930, 0
  %v1067 = vsel %vm589, %v931, 0
  %v1070 = vsel %vm589, %v932, 0
  %v1073 = vsel %vm589, %v933, 0
  %v1076 = vsel %vm589, %v934, 0
  %v1079 = vsel %vm589, %v935, 0
  %v1082 = vsel %vm589, %v936, 0
  %v1085 = vsel %vm589, %v937, 0
  %v1088 = vsel %vm589, %v938, 0
  %v1091 = vsel %vm589, %v939, 0
  %v1094 = vsel %vm589, %v940, 0
  %1096 = vmatprep.subr.mxu0 0.0
  %1097 = vmatpush1.msra.mxu0 %v941
  %1098 = vmatprep.subr.mxu0 0.0
  %1099 = vmatpush1.msra.mxu0 %v942
  %1100 = vmatprep.subr.mxu0 0.0
  %1101 = vmatpush1.msra.mxu0 %v943
  %1102 = vmatprep.subr.mxu0 0.0
  %1103 = vmatpush1.msra.mxu0 %v944
  %1104 = vmatprep.subr.mxu0 0.0
  %1105 = vmatpush1.msra.mxu0 0.0
  %1106 = vmatprep.subr.mxu0 0.0
  %1107 = vmatpush1.msra.mxu0 0.0
  %1108 = vmatprep.subr.mxu0 0.0
  %1109 = vmatpush1.msra.mxu0 0.0
  %1110 = vmatprep.subr.mxu0 0.0
  %1111 = vmatpush1.msra.mxu0 0.0
  %1112 = vmatprep.subr.mxu0 0.0
  %1113 = vmatpush1.msra.mxu0 0.0
  %1114 = vmatprep.subr.mxu0 0.0
  %1115 = vmatpush1.msra.mxu0 0.0
  %1116 = vmatprep.subr.mxu0 0.0
  %1117 = vmatpush1.msra.mxu0 0.0
  %1118 = vmatprep.subr.mxu0 0.0
  %1119 = vmatpush1.msra.mxu0 0.0
  %1120 = vmatprep.subr.mxu0 0.0
  %1121 = vmatpush1.msra.mxu0 0.0
  %1122 = vmatprep.subr.mxu0 0.0
  %1123 = vmatpush1.msra.mxu0 0.0
  %1124 = vmatprep.subr.mxu0 0.0
  %1125 = vmatpush1.msra.mxu0 0.0
  %1126 = vmatprep.subr.mxu0 0.0
  %1127 = vmatpush1.msra.mxu0 0.0
  %1128 = vmatprep.subr.mxu0 0.0
  %1129 = vmatpush1.msra.mxu0 0.0
  %1130 = vmatprep.subr.mxu0 0.0
  %1131 = vmatpush1.msra.mxu0 0.0
  %1132 = vmatprep.subr.mxu0 0.0
  %1133 = vmatpush1.msra.mxu0 0.0
  %1134 = vmatprep.subr.mxu0 0.0
  %1135 = vmatpush1.msra.mxu0 0.0
  %1136 = vmatprep.subr.mxu0 0.0
  %1137 = vmatpush1.msra.mxu0 0.0
  %1138 = vmatprep.subr.mxu0 0.0
  %1139 = vmatpush1.msra.mxu0 0.0
  %1140 = vmatprep.subr.mxu0 0.0
  %1141 = vmatpush1.msra.mxu0 0.0
  %1142 = vmatprep.subr.mxu0 0.0
  %1143 = vmatpush1.msra.mxu0 0.0
  %1144 = vmatprep.subr.mxu0 0.0
  %1145 = vmatpush1.msra.mxu0 0.0
  %1146 = vmatprep.subr.mxu0 0.0
  %1147 = vmatpush1.msra.mxu0 0.0
  %1148 = vmatprep.subr.mxu0 0.0
  %1149 = vmatpush1.msra.mxu0 0.0
  %1150 = vmatprep.subr.mxu0 0.0
  %1151 = vmatpush1.msra.mxu0 0.0
  %1152 = vmatprep.subr.mxu0 0.0
  %1153 = vmatpush1.msra.mxu0 0.0
  %1154 = vmatprep.subr.mxu0 0.0
  %1155 = vmatpush1.msra.mxu0 0.0
  %1156 = vmatprep.subr.mxu0 0.0
  %1157 = vmatpush1.msra.mxu0 0.0
  %1158 = vmatprep.subr.mxu0 0.0
  %1159 = vmatpush1.msra.mxu0 0.0
  %1160 = vmatprep.mubr.f32.mxu0 0.0
  %1161 = vmatmul.mubr.f32.gmra.mrb[0].mxu0 %v953
  %v1162 = vpop.f32.mrb[0].mxu0
  %v1163 = vadd.f32 %v950, %v1162
  %v1164 = vpop.f32.mrb[0].mxu0
  %1165 = vmatprep.mubr.f32.mxu0 0.0
  %1166 = vmatmul.mubr.f32.gmra.mrb[0].mxu0 %v956
  %v1167 = vpop.f32.mrb[0].mxu0
  %v1168 = vadd.f32 %v950, %v1167
  %v1169 = vpop.f32.mrb[0].mxu0
  %1170 = vmatprep.mubr.f32.mxu0 0.0
  %1171 = vmatmul.mubr.f32.gmra.mrb[0].mxu0 %v959
  %v1172 = vpop.f32.mrb[0].mxu0
  %v1173 = vadd.f32 %v950, %v1172
  %v1174 = vpop.f32.mrb[0].mxu0
  %1175 = vmatprep.mubr.f32.mxu0 0.0
  %1176 = vmatmul.mubr.f32.gmra.mrb[0].mxu0 %v962
  %v1177 = vpop.f32.mrb[0].mxu0
  %v1178 = vadd.f32 %v950, %v1177
  %v1179 = vpop.f32.mrb[0].mxu0
  %1180 = vmatprep.mubr.f32.mxu0 0.0
  %1181 = vmatmul.mubr.f32.gmra.mrb[0].mxu0 %v965
  %v1182 = vpop.f32.mrb[0].mxu0
  %v1183 = vadd.f32 %v950, %v1182
  %v1184 = vpop.f32.mrb[0].mxu0
  %1185 = vmatprep.mubr.f32.mxu0 0.0
  %1186 = vmatmul.mubr.f32.gmra.mrb[0].mxu0 %v968
  %v1187 = vpop.f32.mrb[0].mxu0
  %v1188 = vadd.f32 %v950, %v1187
  %v1189 = vpop.f32.mrb[0].mxu0
  %1190 = vmatprep.mubr.f32.mxu0 0.0
  %1191 = vmatmul.mubr.f32.gmra.mrb[0].mxu0 %v971
  %v1192 = vpop.f32.mrb[0].mxu0
  %v1193 = vadd.f32 %v950, %v1192
  %v1194 = vpop.f32.mrb[0].mxu0
  %1195 = vmatprep.mubr.f32.mxu0 0.0
  %1196 = vmatmul.mubr.f32.gmra.mrb[0].mxu0 %v974
  %v1197 = vpop.f32.mrb[0].mxu0
  %v1198 = vadd.f32 %v950, %v1197
  %v1199 = vpop.f32.mrb[0].mxu0
  %1200 = vmatprep.mubr.f32.mxu0 0.0
  %1201 = vmatmul.mubr.f32.gmra.mrb[0].mxu0 %v977
  %v1202 = vpop.f32.mrb[0].mxu0
  %v1203 = vadd.f32 %v950, %v1202
  %v1204 = vpop.f32.mrb[0].mxu0
  %1205 = vmatprep.mubr.f32.mxu0 0.0
  %1206 = vmatmul.mubr.f32.gmra.mrb[0].mxu0 %v980
  %v1207 = vpop.f32.mrb[0].mxu0
  %v1208 = vadd.f32 %v950, %v1207
  %v1209 = vpop.f32.mrb[0].mxu0
  %1210 = vmatprep.mubr.f32.mxu0 0.0
  %1211 = vmatmul.mubr.f32.gmra.mrb[0].mxu0 %v983
  %v1212 = vpop.f32.mrb[0].mxu0
  %v1213 = vadd.f32 %v950, %v1212
  %v1214 = vpop.f32.mrb[0].mxu0
  %1215 = vmatprep.mubr.f32.mxu0 0.0
  %1216 = vmatmul.mubr.f32.gmra.mrb[0].mxu0 %v986
  %v1217 = vpop.f32.mrb[0].mxu0
  %v1218 = vadd.f32 %v950, %v1217
  %v1219 = vpop.f32.mrb[0].mxu0
  %1220 = vmatprep.mubr.f32.mxu0 0.0
  %1221 = vmatmul.mubr.f32.gmra.mrb[0].mxu0 %v989
  %v1222 = vpop.f32.mrb[0].mxu0
  %v1223 = vadd.f32 %v950, %v1222
  %v1224 = vpop.f32.mrb[0].mxu0
  %1225 = vmatprep.mubr.f32.mxu0 0.0
  %1226 = vmatmul.mubr.f32.gmra.mrb[0].mxu0 %v992
  %v1227 = vpop.f32.mrb[0].mxu0
  %v1228 = vadd.f32 %v950, %v1227
  %v1229 = vpop.f32.mrb[0].mxu0
  %1230 = vmatprep.mubr.f32.mxu0 0.0
  %1231 = vmatmul.mubr.f32.gmra.mrb[0].mxu0 %v995
  %v1232 = vpop.f32.mrb[0].mxu0
  %v1233 = vadd.f32 %v950, %v1232
  %v1234 = vpop.f32.mrb[0].mxu0
  %1235 = vmatprep.mubr.f32.mxu0 0.0
  %1236 = vmatmul.mubr.f32.gmra.mrb[0].mxu0 %v998
  %v1237 = vpop.f32.mrb[0].mxu0
  %v1238 = vadd.f32 %v950, %v1237
  %v1239 = vpop.f32.mrb[0].mxu0
  %1240 = vmatprep.mubr.f32.mxu0 0.0
  %1241 = vmatmul.mubr.f32.gmra.mrb[0].mxu0 %v1001
  %v1242 = vpop.f32.mrb[0].mxu0
  %v1243 = vadd.f32 %v950, %v1242
  %v1244 = vpop.f32.mrb[0].mxu0
  %1245 = vmatprep.mubr.f32.mxu0 0.0
  %1246 = vmatmul.mubr.f32.gmra.mrb[0].mxu0 %v1004
  %v1247 = vpop.f32.mrb[0].mxu0
  %v1248 = vadd.f32 %v950, %v1247
  %v1249 = vpop.f32.mrb[0].mxu0
  %1250 = vmatprep.mubr.f32.mxu0 0.0
  %1251 = vmatmul.mubr.f32.gmra.mrb[0].mxu0 %v1007
  %v1252 = vpop.f32.mrb[0].mxu0
  %v1253 = vadd.f32 %v950, %v1252
  %v1254 = vpop.f32.mrb[0].mxu0
  %1255 = vmatprep.mubr.f32.mxu0 0.0
  %1256 = vmatmul.mubr.f32.gmra.mrb[0].mxu0 %v1010
  %v1257 = vpop.f32.mrb[0].mxu0
  %v1258 = vadd.f32 %v950, %v1257
  %v1259 = vpop.f32.mrb[0].mxu0
  %1260 = vmatprep.mubr.f32.mxu0 0.0
  %1261 = vmatmul.mubr.f32.gmra.mrb[0].mxu0 %v1013
  %v1262 = vpop.f32.mrb[0].mxu0
  %v1263 = vadd.f32 %v950, %v1262
  %v1264 = vpop.f32.mrb[0].mxu0
  %1265 = vmatprep.mubr.f32.mxu0 0.0
  %1266 = vmatmul.mubr.f32.gmra.mrb[0].mxu0 %v1016
  %v1267 = vpop.f32.mrb[0].mxu0
  %v1268 = vadd.f32 %v950, %v1267
  %v1269 = vpop.f32.mrb[0].mxu0
  %1270 = vmatprep.mubr.f32.mxu0 0.0
  %1271 = vmatmul.mubr.f32.gmra.mrb[0].mxu0 %v1019
  %v1272 = vpop.f32.mrb[0].mxu0
  %v1273 = vadd.f32 %v950, %v1272
  %v1274 = vpop.f32.mrb[0].mxu0
  %1275 = vmatprep.mubr.f32.mxu0 0.0
  %1276 = vmatmul.mubr.f32.gmra.mrb[0].mxu0 %v1022
  %v1277 = vpop.f32.mrb[0].mxu0
  %v1278 = vadd.f32 %v950, %v1277
  %v1279 = vpop.f32.mrb[0].mxu0
  %1280 = vmatprep.mubr.f32.mxu0 0.0
  %1281 = vmatmul.mubr.f32.gmra.mrb[0].mxu0 %v1025
  %v1282 = vpop.f32.mrb[0].mxu0
  %v1283 = vadd.f32 %v950, %v1282
  %v1284 = vpop.f32.mrb[0].mxu0
  %1285 = vmatprep.mubr.f32.mxu0 0.0
  %1286 = vmatmul.mubr.f32.gmra.mrb[0].mxu0 %v1028
  %v1287 = vpop.f32.mrb[0].mxu0
  %v1288 = vadd.f32 %v950, %v1287
  %v1289 = vpop.f32.mrb[0].mxu0
  %1290 = vmatprep.mubr.f32.mxu0 0.0
  %1291 = vmatmul.mubr.f32.gmra.mrb[0].mxu0 %v1031
  %v1292 = vpop.f32.mrb[0].mxu0
  %v1293 = vadd.f32 %v950, %v1292
  %v1294 = vpop.f32.mrb[0].mxu0
  %1295 = vmatprep.mubr.f32.mxu0 0.0
  %1296 = vmatmul.mubr.f32.gmra.mrb[0].mxu0 %v1034
  %v1297 = vpop.f32.mrb[0].mxu0
  %v1298 = vadd.f32 %v950, %v1297
  %v1299 = vpop.f32.mrb[0].mxu0
  %1300 = vmatprep.mubr.f32.mxu0 0.0
  %1301 = vmatmul.mubr.f32.gmra.mrb[0].mxu0 %v1037
  %v1302 = vpop.f32.mrb[0].mxu0
  %v1303 = vadd.f32 %v950, %v1302
  %v1304 = vpop.f32.mrb[0].mxu0
  %1305 = vmatprep.mubr.f32.mxu0 0.0
  %1306 = vmatmul.mubr.f32.gmra.mrb[0].mxu0 %v1040
  %v1307 = vpop.f32.mrb[0].mxu0
  %v1308 = vadd.f32 %v950, %v1307
  %v1309 = vpop.f32.mrb[0].mxu0
  %1310 = vmatprep.mubr.f32.mxu0 0.0
  %1311 = vmatmul.mubr.f32.gmra.mrb[0].mxu0 %v1043
  %v1312 = vpop.f32.mrb[0].mxu0
  %v1313 = vadd.f32 %v950, %v1312
  %v1314 = vpop.f32.mrb[0].mxu0
  %1315 = vmatprep.mubr.f32.mxu0 0.0
  %1316 = vmatmul.mubr.f32.gmra.mrb[0].mxu0 %v1046
  %v1317 = vpop.f32.mrb[0].mxu0
  %v1318 = vadd.f32 %v950, %v1317
  %v1319 = vpop.f32.mrb[0].mxu0
  %1320 = vmatprep.mubr.f32.mxu0 0.0
  %1321 = vmatmul.mubr.f32.gmra.mrb[0].mxu0 %v1049
  %v1322 = vpop.f32.mrb[0].mxu0
  %v1323 = vadd.f32 %v950, %v1322
  %v1324 = vpop.f32.mrb[0].mxu0
  %1325 = vmatprep.mubr.f32.mxu0 0.0
  %1326 = vmatmul.mubr.f32.gmra.mrb[0].mxu0 %v1052
  %v1327 = vpop.f32.mrb[0].mxu0
  %v1328 = vadd.f32 %v950, %v1327
  %v1329 = vpop.f32.mrb[0].mxu0
  %1330 = vmatprep.mubr.f32.mxu0 0.0
  %1331 = vmatmul.mubr.f32.gmra.mrb[0].mxu0 %v1055
  %v1332 = vpop.f32.mrb[0].mxu0
  %v1333 = vadd.f32 %v950, %v1332
  %v1334 = vpop.f32.mrb[0].mxu0
  %1335 = vmatprep.mubr.f32.mxu0 0.0
  %1336 = vmatmul.mubr.f32.gmra.mrb[0].mxu0 %v1058
  %v1337 = vpop.f32.mrb[0].mxu0
  %v1338 = vadd.f32 %v950, %v1337
  %v1339 = vpop.f32.mrb[0].mxu0
  %1340 = vmatprep.mubr.f32.mxu0 0.0
  %1341 = vmatmul.mubr.f32.gmra.mrb[0].mxu0 %v1061
  %v1342 = vpop.f32.mrb[0].mxu0
  %v1343 = vadd.f32 %v950, %v1342
  %v1344 = vpop.f32.mrb[0].mxu0
  %1345 = vmatprep.mubr.f32.mxu0 0.0
  %1346 = vmatmul.mubr.f32.gmra.mrb[0].mxu0 %v1064
  %v1347 = vpop.f32.mrb[0].mxu0
  %v1348 = vadd.f32 %v950, %v1347
  %v1349 = vpop.f32.mrb[0].mxu0
  %1350 = vmatprep.mubr.f32.mxu0 0.0
  %1351 = vmatmul.mubr.f32.gmra.mrb[0].mxu0 %v1067
  %v1352 = vpop.f32.mrb[0].mxu0
  %v1353 = vadd.f32 %v950, %v1352
  %v1354 = vpop.f32.mrb[0].mxu0
  %1355 = vmatprep.mubr.f32.mxu0 0.0
  %1356 = vmatmul.mubr.f32.gmra.mrb[0].mxu0 %v1070
  %v1357 = vpop.f32.mrb[0].mxu0
  %v1358 = vadd.f32 %v950, %v1357
  %v1359 = vpop.f32.mrb[0].mxu0
  %1360 = vmatprep.mubr.f32.mxu0 0.0
  %1361 = vmatmul.mubr.f32.gmra.mrb[0].mxu0 %v1073
  %v1362 = vpop.f32.mrb[0].mxu0
  %v1363 = vadd.f32 %v950, %v1362
  %v1364 = vpop.f32.mrb[0].mxu0
  %1365 = vmatprep.mubr.f32.mxu0 0.0
  %1366 = vmatmul.mubr.f32.gmra.mrb[0].mxu0 %v1076
  %v1367 = vpop.f32.mrb[0].mxu0
  %v1368 = vadd.f32 %v950, %v1367
  %v1369 = vpop.f32.mrb[0].mxu0
  %1370 = vmatprep.mubr.f32.mxu0 0.0
  %1371 = vmatmul.mubr.f32.gmra.mrb[0].mxu0 %v1079
  %v1372 = vpop.f32.mrb[0].mxu0
  %v1373 = vadd.f32 %v950, %v1372
  %v1374 = vpop.f32.mrb[0].mxu0
  %1375 = vmatprep.mubr.f32.mxu0 0.0
  %1376 = vmatmul.mubr.f32.gmra.mrb[0].mxu0 %v1082
  %v1377 = vpop.f32.mrb[0].mxu0
  %v1378 = vadd.f32 %v950, %v1377
  %v1379 = vpop.f32.mrb[0].mxu0
  %1380 = vmatprep.mubr.f32.mxu0 0.0
  %1381 = vmatmul.mubr.f32.gmra.mrb[0].mxu0 %v1085
  %v1382 = vpop.f32.mrb[0].mxu0
  %v1383 = vadd.f32 %v950, %v1382
  %v1384 = vpop.f32.mrb[0].mxu0
  %1385 = vmatprep.mubr.f32.mxu0 0.0
  %1386 = vmatmul.mubr.f32.gmra.mrb[0].mxu0 %v1088
  %v1387 = vpop.f32.mrb[0].mxu0
  %v1388 = vadd.f32 %v950, %v1387
  %v1389 = vpop.f32.mrb[0].mxu0
  %1390 = vmatprep.mubr.f32.mxu0 0.0
  %1391 = vmatmul.mubr.f32.gmra.mrb[0].mxu0 %v1091
  %v1392 = vpop.f32.mrb[0].mxu0
  %v1393 = vadd.f32 %v950, %v1392
  %v1394 = vpop.f32.mrb[0].mxu0
  %1395 = vmatprep.mubr.f32.mxu0 0.0
  %1396 = vmatmul.mubr.f32.gmra.mrb[0].mxu0 %v1094
  %v1397 = vpop.f32.mrb[0].mxu0
  %v1398 = vadd.f32 %v950, %v1397
  %v1399 = vpop.f32.mrb[0].mxu0
  %1400 = vdwg.mxu0
  %v1401 = vmax.f32 %v1163, 0.0
  %v1402 = vmax.f32 %v1168, 0.0
  %v1403 = vmax.f32 %v1173, 0.0
  %v1404 = vmax.f32 %v1178, 0.0
  %v1405 = vmax.f32 %v1183, 0.0
  %v1406 = vmax.f32 %v1188, 0.0
  %v1407 = vmax.f32 %v1193, 0.0
  %v1408 = vmax.f32 %v1198, 0.0
  %v1409 = vmax.f32 %v1203, 0.0
  %v1410 = vmax.f32 %v1208, 0.0
  %v1411 = vmax.f32 %v1213, 0.0
  %v1412 = vmax.f32 %v1218, 0.0
  %v1413 = vmax.f32 %v1223, 0.0
  %v1414 = vmax.f32 %v1228, 0.0
  %v1415 = vmax.f32 %v1233, 0.0
  %v1416 = vmax.f32 %v1238, 0.0
  %v1417 = vmax.f32 %v1243, 0.0
  %v1418 = vmax.f32 %v1248, 0.0
  %v1419 = vmax.f32 %v1253, 0.0
  %v1420 = vmax.f32 %v1258, 0.0
  %v1421 = vmax.f32 %v1263, 0.0
  %v1422 = vmax.f32 %v1268, 0.0
  %v1423 = vmax.f32 %v1273, 0.0
  %v1424 = vmax.f32 %v1278, 0.0
  %v1425 = vmax.f32 %v1283, 0.0
  %v1426 = vmax.f32 %v1288, 0.0
  %v1427 = vmax.f32 %v1293, 0.0
  %v1428 = vmax.f32 %v1298, 0.0
  %v1429 = vmax.f32 %v1303, 0.0
  %v1430 = vmax.f32 %v1308, 0.0
  %v1431 = vmax.f32 %v1313, 0.0
  %v1432 = vmax.f32 %v1318, 0.0
  %v1433 = vmax.f32 %v1323, 0.0
  %v1434 = vmax.f32 %v1328, 0.0
  %v1435 = vmax.f32 %v1333, 0.0
  %v1436 = vmax.f32 %v1338, 0.0
  %v1437 = vmax.f32 %v1343, 0.0
  %v1438 = vmax.f32 %v1348, 0.0
  %v1439 = vmax.f32 %v1353, 0.0
  %v1440 = vmax.f32 %v1358, 0.0
  %v1441 = vmax.f32 %v1363, 0.0
  %v1442 = vmax.f32 %v1368, 0.0
  %v1443 = vmax.f32 %v1373, 0.0
  %v1444 = vmax.f32 %v1378, 0.0
  %v1445 = vmax.f32 %v1383, 0.0
  %v1446 = vmax.f32 %v1388, 0.0
  %v1447 = vmax.f32 %v1393, 0.0
  %v1448 = vmax.f32 %v1398, 0.0
  %1449 = vst.msk [vmem:[%s10] sm:$0xff] %vm589, %v1401
  %1450 = vst.msk [vmem:[%s10 + $0x8] sm:$0xff] %vm589, %v1402
  %1451 = vst.msk [vmem:[%s10 + $0x10] sm:$0xff] %vm589, %v1403
  %1452 = vst.msk [vmem:[%s10 + $0x18] sm:$0xff] %vm589, %v1404
  %1453 = vst.msk [vmem:[%s10 + $0x20] sm:$0xff] %vm589, %v1405
  %1454 = vst.msk [vmem:[%s10 + $0x28] sm:$0xff] %vm589, %v1406
  %1455 = vst.msk [vmem:[%s10 + $0x30] sm:$0xff] %vm589, %v1407
  %1456 = vst.msk [vmem:[%s10 + $0x38] sm:$0xff] %vm589, %v1408
  %1457 = vst.msk [vmem:[%s10 + $0x40] sm:$0xff] %vm589, %v1409
  %1458 = vst.msk [vmem:[%s10 + $0x48] sm:$0xff] %vm589, %v1410
  %1459 = vst.msk [vmem:[%s10 + $0x50] sm:$0xff] %vm589, %v1411
  %1460 = vst.msk [vmem:[%s10 + $0x58] sm:$0xff] %vm589, %v1412
  %1461 = vst.msk [vmem:[%s10 + $0x60] sm:$0xff] %vm589, %v1413
  %1462 = vst.msk [vmem:[%s10 + $0x68] sm:$0xff] %vm589, %v1414
  %1463 = vst.msk [vmem:[%s10 + $0x70] sm:$0xff] %vm589, %v1415
  %1464 = vst.msk [vmem:[%s10 + $0x78] sm:$0xff] %vm589, %v1416
  %1465 = vst.msk [vmem:[%s10 + $0x80] sm:$0xff] %vm589, %v1417
  %1466 = vst.msk [vmem:[%s10 + $0x88] sm:$0xff] %vm589, %v1418
  %1467 = vst.msk [vmem:[%s10 + $0x90] sm:$0xff] %vm589, %v1419
  %1468 = vst.msk [vmem:[%s10 + $0x98] sm:$0xff] %vm589, %v1420
  %1469 = vst.msk [vmem:[%s10 + $0xa0] sm:$0xff] %vm589, %v1421
  %1470 = vst.msk [vmem:[%s10 + $0xa8] sm:$0xff] %vm589, %v1422
  %1471 = vst.msk [vmem:[%s10 + $0xb0] sm:$0xff] %vm589, %v1423
  %1472 = vst.msk [vmem:[%s10 + $0xb8] sm:$0xff] %vm589, %v1424
  %1473 = vst.msk [vmem:[%s10 + $0xc0] sm:$0xff] %vm589, %v1425
  %1474 = vst.msk [vmem:[%s10 + $0xc8] sm:$0xff] %vm589, %v1426
  %1475 = vst.msk [vmem:[%s10 + $0xd0] sm:$0xff] %vm589, %v1427
  %1476 = vst.msk [vmem:[%s10 + $0xd8] sm:$0xff] %vm589, %v1428
  %1477 = vst.msk [vmem:[%s10 + $0xe0] sm:$0xff] %vm589, %v1429
  %1478 = vst.msk [vmem:[%s10 + $0xe8] sm:$0xff] %vm589, %v1430
  %1479 = vst.msk [vmem:[%s10 + $0xf0] sm:$0xff] %vm589, %v1431
  %1480 = vst.msk [vmem:[%s10 + $0xf8] sm:$0xff] %vm589, %v1432
  %1481 = vst.msk [vmem:[%s10 + $0x100] sm:$0xff] %vm589, %v1433
  %1482 = vst.msk [vmem:[%s10 + $0x108] sm:$0xff] %vm589, %v1434
  %1483 = vst.msk [vmem:[%s10 + $0x110] sm:$0xff] %vm589, %v1435
  %1484 = vst.msk [vmem:[%s10 + $0x118] sm:$0xff] %vm589, %v1436
  %1485 = vst.msk [vmem:[%s10 + $0x120] sm:$0xff] %vm589, %v1437
  %1486 = vst.msk [vmem:[%s10 + $0x128] sm:$0xff] %vm589, %v1438
  %1487 = vst.msk [vmem:[%s10 + $0x130] sm:$0xff] %vm589, %v1439
  %1488 = vst.msk [vmem:[%s10 + $0x138] sm:$0xff] %vm589, %v1440
  %1489 = vst.msk [vmem:[%s10 + $0x140] sm:$0xff] %vm589, %v1441
  %1490 = vst.msk [vmem:[%s10 + $0x148] sm:$0xff] %vm589, %v1442
  %1491 = vst.msk [vmem:[%s10 + $0x150] sm:$0xff] %vm589, %v1443
  %1492 = vst.msk [vmem:[%s10 + $0x158] sm:$0xff] %vm589, %v1444
  %1493 = vst.msk [vmem:[%s10 + $0x160] sm:$0xff] %vm589, %v1445
  %1494 = vst.msk [vmem:[%s10 + $0x168] sm:$0xff] %vm589, %v1446
  %1495 = vst.msk [vmem:[%s10 + $0x170] sm:$0xff] %vm589, %v1447
  %1496 = vst.msk [vmem:[%s10 + $0x178] sm:$0xff] %vm589, %v1448
  %v1497 = vld [vmem:[%s6] sm:$0xff]
  %v1498 = vld [vmem:[%s6 + $0x8] sm:$0xff]
  %v1499 = vld [vmem:[%s6 + $0x10] sm:$0xff]
  %v1500 = vld [vmem:[%s6 + $0x18] sm:$0xff]
  %v1501 = vld [vmem:[%s7] sm:$0x1]
  %v1503 = vlaneseq
  %v1504 = vshrl.u32 %v1503, 7
  %v1505 = vsub.s32 0, %v1504
  %v1506 = vrot.slane %v1501, %v1505
  %v1509 = vsel %vm589, %v1401, 0
  %v1512 = vsel %vm589, %v1402, 0
  %v1515 = vsel %vm589, %v1403, 0
  %v1518 = vsel %vm589, %v1404, 0
  %v1521 = vsel %vm589, %v1405, 0
  %v1524 = vsel %vm589, %v1406, 0
  %v1527 = vsel %vm589, %v1407, 0
  %v1530 = vsel %vm589, %v1408, 0
  %v1533 = vsel %vm589, %v1409, 0
  %v1536 = vsel %vm589, %v1410, 0
  %v1539 = vsel %vm589, %v1411, 0
  %v1542 = vsel %vm589, %v1412, 0
  %v1545 = vsel %vm589, %v1413, 0
  %v1548 = vsel %vm589, %v1414, 0
  %v1551 = vsel %vm589, %v1415, 0
  %v1554 = vsel %vm589, %v1416, 0
  %v1557 = vsel %vm589, %v1417, 0
  %v1560 = vsel %vm589, %v1418, 0
  %v1563 = vsel %vm589, %v1419, 0
  %v1566 = vsel %vm589, %v1420, 0
  %v1569 = vsel %vm589, %v1421, 0
  %v1572 = vsel %vm589, %v1422, 0
  %v1575 = vsel %vm589, %v1423, 0
  %v1578 = vsel %vm589, %v1424, 0
  %v1581 = vsel %vm589, %v1425, 0
  %v1584 = vsel %vm589, %v1426, 0
  %v1587 = vsel %vm589, %v1427, 0
  %v1590 = vsel %vm589, %v1428, 0
  %v1593 = vsel %vm589, %v1429, 0
  %v1596 = vsel %vm589, %v1430, 0
  %v1599 = vsel %vm589, %v1431, 0
  %v1602 = vsel %vm589, %v1432, 0
  %v1605 = vsel %vm589, %v1433, 0
  %v1608 = vsel %vm589, %v1434, 0
  %v1611 = vsel %vm589, %v1435, 0
  %v1614 = vsel %vm589, %v1436, 0
  %v1617 = vsel %vm589, %v1437, 0
  %v1620 = vsel %vm589, %v1438, 0
  %v1623 = vsel %vm589, %v1439, 0
  %v1626 = vsel %vm589, %v1440, 0
  %v1629 = vsel %vm589, %v1441, 0
  %v1632 = vsel %vm589, %v1442, 0
  %v1635 = vsel %vm589, %v1443, 0
  %v1638 = vsel %vm589, %v1444, 0
  %v1641 = vsel %vm589, %v1445, 0
  %v1644 = vsel %vm589, %v1446, 0
  %v1647 = vsel %vm589, %v1447, 0
  %v1650 = vsel %vm589, %v1448, 0
  %1652 = vmatprep.subr.mxu0 0.0
  %1653 = vmatpush1.msra.mxu0 %v1497
  %1654 = vmatprep.subr.mxu0 0.0
  %1655 = vmatpush1.msra.mxu0 %v1498
  %1656 = vmatprep.subr.mxu0 0.0
  %1657 = vmatpush1.msra.mxu0 %v1499
  %1658 = vmatprep.subr.mxu0 0.0
  %1659 = vmatpush1.msra.mxu0 %v1500
  %1660 = vmatprep.subr.mxu0 0.0
  %1661 = vmatpush1.msra.mxu0 0.0
  %1662 = vmatprep.subr.mxu0 0.0
  %1663 = vmatpush1.msra.mxu0 0.0
  %1664 = vmatprep.subr.mxu0 0.0
  %1665 = vmatpush1.msra.mxu0 0.0
  %1666 = vmatprep.subr.mxu0 0.0
  %1667 = vmatpush1.msra.mxu0 0.0
  %1668 = vmatprep.subr.mxu0 0.0
  %1669 = vmatpush1.msra.mxu0 0.0
  %1670 = vmatprep.subr.mxu0 0.0
  %1671 = vmatpush1.msra.mxu0 0.0
  %1672 = vmatprep.subr.mxu0 0.0
  %1673 = vmatpush1.msra.mxu0 0.0
  %1674 = vmatprep.subr.mxu0 0.0
  %1675 = vmatpush1.msra.mxu0 0.0
  %1676 = vmatprep.subr.mxu0 0.0
  %1677 = vmatpush1.msra.mxu0 0.0
  %1678 = vmatprep.subr.mxu0 0.0
  %1679 = vmatpush1.msra.mxu0 0.0
  %1680 = vmatprep.subr.mxu0 0.0
  %1681 = vmatpush1.msra.mxu0 0.0
  %1682 = vmatprep.subr.mxu0 0.0
  %1683 = vmatpush1.msra.mxu0 0.0
  %1684 = vmatprep.subr.mxu0 0.0
  %1685 = vmatpush1.msra.mxu0 0.0
  %1686 = vmatprep.subr.mxu0 0.0
  %1687 = vmatpush1.msra.mxu0 0.0
  %1688 = vmatprep.subr.mxu0 0.0
  %1689 = vmatpush1.msra.mxu0 0.0
  %1690 = vmatprep.subr.mxu0 0.0
  %1691 = vmatpush1.msra.mxu0 0.0
  %1692 = vmatprep.subr.mxu0 0.0
  %1693 = vmatpush1.msra.mxu0 0.0
  %1694 = vmatprep.subr.mxu0 0.0
  %1695 = vmatpush1.msra.mxu0 0.0
  %1696 = vmatprep.subr.mxu0 0.0
  %1697 = vmatpush1.msra.mxu0 0.0
  %1698 = vmatprep.subr.mxu0 0.0
  %1699 = vmatpush1.msra.mxu0 0.0
  %1700 = vmatprep.subr.mxu0 0.0
  %1701 = vmatpush1.msra.mxu0 0.0
  %1702 = vmatprep.subr.mxu0 0.0
  %1703 = vmatpush1.msra.mxu0 0.0
  %1704 = vmatprep.subr.mxu0 0.0
  %1705 = vmatpush1.msra.mxu0 0.0
  %1706 = vmatprep.subr.mxu0 0.0
  %1707 = vmatpush1.msra.mxu0 0.0
  %1708 = vmatprep.subr.mxu0 0.0
  %1709 = vmatpush1.msra.mxu0 0.0
  %1710 = vmatprep.subr.mxu0 0.0
  %1711 = vmatpush1.msra.mxu0 0.0
  %1712 = vmatprep.subr.mxu0 0.0
  %1713 = vmatpush1.msra.mxu0 0.0
  %1714 = vmatprep.subr.mxu0 0.0
  %1715 = vmatpush1.msra.mxu0 0.0
  %1716 = vmatprep.mubr.f32.mxu0 0.0
  %1717 = vmatmul.mubr.f32.gmra.mrb[0].mxu0 %v1509
  %v1718 = vpop.f32.mrb[0].mxu0
  %v1719 = vadd.f32 %v1506, %v1718
  %v1720 = vpop.f32.mrb[0].mxu0
  %1721 = vmatprep.mubr.f32.mxu0 0.0
  %1722 = vmatmul.mubr.f32.gmra.mrb[0].mxu0 %v1512
  %v1723 = vpop.f32.mrb[0].mxu0
  %v1724 = vadd.f32 %v1506, %v1723
  %v1725 = vpop.f32.mrb[0].mxu0
  %1726 = vmatprep.mubr.f32.mxu0 0.0
  %1727 = vmatmul.mubr.f32.gmra.mrb[0].mxu0 %v1515
  %v1728 = vpop.f32.mrb[0].mxu0
  %v1729 = vadd.f32 %v1506, %v1728
  %v1730 = vpop.f32.mrb[0].mxu0
  %1731 = vmatprep.mubr.f32.mxu0 0.0
  %1732 = vmatmul.mubr.f32.gmra.mrb[0].mxu0 %v1518
  %v1733 = vpop.f32.mrb[0].mxu0
  %v1734 = vadd.f32 %v1506, %v1733
  %v1735 = vpop.f32.mrb[0].mxu0
  %1736 = vmatprep.mubr.f32.mxu0 0.0
  %1737 = vmatmul.mubr.f32.gmra.mrb[0].mxu0 %v1521
  %v1738 = vpop.f32.mrb[0].mxu0
  %v1739 = vadd.f32 %v1506, %v1738
  %v1740 = vpop.f32.mrb[0].mxu0
  %1741 = vmatprep.mubr.f32.mxu0 0.0
  %1742 = vmatmul.mubr.f32.gmra.mrb[0].mxu0 %v1524
  %v1743 = vpop.f32.mrb[0].mxu0
  %v1744 = vadd.f32 %v1506, %v1743
  %v1745 = vpop.f32.mrb[0].mxu0
  %1746 = vmatprep.mubr.f32.mxu0 0.0
  %1747 = vmatmul.mubr.f32.gmra.mrb[0].mxu0 %v1527
  %v1748 = vpop.f32.mrb[0].mxu0
  %v1749 = vadd.f32 %v1506, %v1748
  %v1750 = vpop.f32.mrb[0].mxu0
  %1751 = vmatprep.mubr.f32.mxu0 0.0
  %1752 = vmatmul.mubr.f32.gmra.mrb[0].mxu0 %v1530
  %v1753 = vpop.f32.mrb[0].mxu0
  %v1754 = vadd.f32 %v1506, %v1753
  %v1755 = vpop.f32.mrb[0].mxu0
  %1756 = vmatprep.mubr.f32.mxu0 0.0
  %1757 = vmatmul.mubr.f32.gmra.mrb[0].mxu0 %v1533
  %v1758 = vpop.f32.mrb[0].mxu0
  %v1759 = vadd.f32 %v1506, %v1758
  %v1760 = vpop.f32.mrb[0].mxu0
  %1761 = vmatprep.mubr.f32.mxu0 0.0
  %1762 = vmatmul.mubr.f32.gmra.mrb[0].mxu0 %v1536
  %v1763 = vpop.f32.mrb[0].mxu0
  %v1764 = vadd.f32 %v1506, %v1763
  %v1765 = vpop.f32.mrb[0].mxu0
  %1766 = vmatprep.mubr.f32.mxu0 0.0
  %1767 = vmatmul.mubr.f32.gmra.mrb[0].mxu0 %v1539
  %v1768 = vpop.f32.mrb[0].mxu0
  %v1769 = vadd.f32 %v1506, %v1768
  %v1770 = vpop.f32.mrb[0].mxu0
  %1771 = vmatprep.mubr.f32.mxu0 0.0
  %1772 = vmatmul.mubr.f32.gmra.mrb[0].mxu0 %v1542
  %v1773 = vpop.f32.mrb[0].mxu0
  %v1774 = vadd.f32 %v1506, %v1773
  %v1775 = vpop.f32.mrb[0].mxu0
  %1776 = vmatprep.mubr.f32.mxu0 0.0
  %1777 = vmatmul.mubr.f32.gmra.mrb[0].mxu0 %v1545
  %v1778 = vpop.f32.mrb[0].mxu0
  %v1779 = vadd.f32 %v1506, %v1778
  %v1780 = vpop.f32.mrb[0].mxu0
  %1781 = vmatprep.mubr.f32.mxu0 0.0
  %1782 = vmatmul.mubr.f32.gmra.mrb[0].mxu0 %v1548
  %v1783 = vpop.f32.mrb[0].mxu0
  %v1784 = vadd.f32 %v1506, %v1783
  %v1785 = vpop.f32.mrb[0].mxu0
  %1786 = vmatprep.mubr.f32.mxu0 0.0
  %1787 = vmatmul.mubr.f32.gmra.mrb[0].mxu0 %v1551
  %v1788 = vpop.f32.mrb[0].mxu0
  %v1789 = vadd.f32 %v1506, %v1788
  %v1790 = vpop.f32.mrb[0].mxu0
  %1791 = vmatprep.mubr.f32.mxu0 0.0
  %1792 = vmatmul.mubr.f32.gmra.mrb[0].mxu0 %v1554
  %v1793 = vpop.f32.mrb[0].mxu0
  %v1794 = vadd.f32 %v1506, %v1793
  %v1795 = vpop.f32.mrb[0].mxu0
  %1796 = vmatprep.mubr.f32.mxu0 0.0
  %1797 = vmatmul.mubr.f32.gmra.mrb[0].mxu0 %v1557
  %v1798 = vpop.f32.mrb[0].mxu0
  %v1799 = vadd.f32 %v1506, %v1798
  %v1800 = vpop.f32.mrb[0].mxu0
  %1801 = vmatprep.mubr.f32.mxu0 0.0
  %1802 = vmatmul.mubr.f32.gmra.mrb[0].mxu0 %v1560
  %v1803 = vpop.f32.mrb[0].mxu0
  %v1804 = vadd.f32 %v1506, %v1803
  %v1805 = vpop.f32.mrb[0].mxu0
  %1806 = vmatprep.mubr.f32.mxu0 0.0
  %1807 = vmatmul.mubr.f32.gmra.mrb[0].mxu0 %v1563
  %v1808 = vpop.f32.mrb[0].mxu0
  %v1809 = vadd.f32 %v1506, %v1808
  %v1810 = vpop.f32.mrb[0].mxu0
  %1811 = vmatprep.mubr.f32.mxu0 0.0
  %1812 = vmatmul.mubr.f32.gmra.mrb[0].mxu0 %v1566
  %v1813 = vpop.f32.mrb[0].mxu0
  %v1814 = vadd.f32 %v1506, %v1813
  %v1815 = vpop.f32.mrb[0].mxu0
  %1816 = vmatprep.mubr.f32.mxu0 0.0
  %1817 = vmatmul.mubr.f32.gmra.mrb[0].mxu0 %v1569
  %v1818 = vpop.f32.mrb[0].mxu0
  %v1819 = vadd.f32 %v1506, %v1818
  %v1820 = vpop.f32.mrb[0].mxu0
  %1821 = vmatprep.mubr.f32.mxu0 0.0
  %1822 = vmatmul.mubr.f32.gmra.mrb[0].mxu0 %v1572
  %v1823 = vpop.f32.mrb[0].mxu0
  %v1824 = vadd.f32 %v1506, %v1823
  %v1825 = vpop.f32.mrb[0].mxu0
  %1826 = vmatprep.mubr.f32.mxu0 0.0
  %1827 = vmatmul.mubr.f32.gmra.mrb[0].mxu0 %v1575
  %v1828 = vpop.f32.mrb[0].mxu0
  %v1829 = vadd.f32 %v1506, %v1828
  %v1830 = vpop.f32.mrb[0].mxu0
  %1831 = vmatprep.mubr.f32.mxu0 0.0
  %1832 = vmatmul.mubr.f32.gmra.mrb[0].mxu0 %v1578
  %v1833 = vpop.f32.mrb[0].mxu0
  %v1834 = vadd.f32 %v1506, %v1833
  %v1835 = vpop.f32.mrb[0].mxu0
  %1836 = vmatprep.mubr.f32.mxu0 0.0
  %1837 = vmatmul.mubr.f32.gmra.mrb[0].mxu0 %v1581
  %v1838 = vpop.f32.mrb[0].mxu0
  %v1839 = vadd.f32 %v1506, %v1838
  %v1840 = vpop.f32.mrb[0].mxu0
  %1841 = vmatprep.mubr.f32.mxu0 0.0
  %1842 = vmatmul.mubr.f32.gmra.mrb[0].mxu0 %v1584
  %v1843 = vpop.f32.mrb[0].mxu0
  %v1844 = vadd.f32 %v1506, %v1843
  %v1845 = vpop.f32.mrb[0].mxu0
  %1846 = vmatprep.mubr.f32.mxu0 0.0
  %1847 = vmatmul.mubr.f32.gmra.mrb[0].mxu0 %v1587
  %v1848 = vpop.f32.mrb[0].mxu0
  %v1849 = vadd.f32 %v1506, %v1848
  %v1850 = vpop.f32.mrb[0].mxu0
  %1851 = vmatprep.mubr.f32.mxu0 0.0
  %1852 = vmatmul.mubr.f32.gmra.mrb[0].mxu0 %v1590
  %v1853 = vpop.f32.mrb[0].mxu0
  %v1854 = vadd.f32 %v1506, %v1853
  %v1855 = vpop.f32.mrb[0].mxu0
  %1856 = vmatprep.mubr.f32.mxu0 0.0
  %1857 = vmatmul.mubr.f32.gmra.mrb[0].mxu0 %v1593
  %v1858 = vpop.f32.mrb[0].mxu0
  %v1859 = vadd.f32 %v1506, %v1858
  %v1860 = vpop.f32.mrb[0].mxu0
  %1861 = vmatprep.mubr.f32.mxu0 0.0
  %1862 = vmatmul.mubr.f32.gmra.mrb[0].mxu0 %v1596
  %v1863 = vpop.f32.mrb[0].mxu0
  %v1864 = vadd.f32 %v1506, %v1863
  %v1865 = vpop.f32.mrb[0].mxu0
  %1866 = vmatprep.mubr.f32.mxu0 0.0
  %1867 = vmatmul.mubr.f32.gmra.mrb[0].mxu0 %v1599
  %v1868 = vpop.f32.mrb[0].mxu0
  %v1869 = vadd.f32 %v1506, %v1868
  %v1870 = vpop.f32.mrb[0].mxu0
  %1871 = vmatprep.mubr.f32.mxu0 0.0
  %1872 = vmatmul.mubr.f32.gmra.mrb[0].mxu0 %v1602
  %v1873 = vpop.f32.mrb[0].mxu0
  %v1874 = vadd.f32 %v1506, %v1873
  %v1875 = vpop.f32.mrb[0].mxu0
  %1876 = vmatprep.mubr.f32.mxu0 0.0
  %1877 = vmatmul.mubr.f32.gmra.mrb[0].mxu0 %v1605
  %v1878 = vpop.f32.mrb[0].mxu0
  %v1879 = vadd.f32 %v1506, %v1878
  %v1880 = vpop.f32.mrb[0].mxu0
  %1881 = vmatprep.mubr.f32.mxu0 0.0
  %1882 = vmatmul.mubr.f32.gmra.mrb[0].mxu0 %v1608
  %v1883 = vpop.f32.mrb[0].mxu0
  %v1884 = vadd.f32 %v1506, %v1883
  %v1885 = vpop.f32.mrb[0].mxu0
  %1886 = vmatprep.mubr.f32.mxu0 0.0
  %1887 = vmatmul.mubr.f32.gmra.mrb[0].mxu0 %v1611
  %v1888 = vpop.f32.mrb[0].mxu0
  %v1889 = vadd.f32 %v1506, %v1888
  %v1890 = vpop.f32.mrb[0].mxu0
  %1891 = vmatprep.mubr.f32.mxu0 0.0
  %1892 = vmatmul.mubr.f32.gmra.mrb[0].mxu0 %v1614
  %v1893 = vpop.f32.mrb[0].mxu0
  %v1894 = vadd.f32 %v1506, %v1893
  %v1895 = vpop.f32.mrb[0].mxu0
  %1896 = vmatprep.mubr.f32.mxu0 0.0
  %1897 = vmatmul.mubr.f32.gmra.mrb[0].mxu0 %v1617
  %v1898 = vpop.f32.mrb[0].mxu0
  %v1899 = vadd.f32 %v1506, %v1898
  %v1900 = vpop.f32.mrb[0].mxu0
  %1901 = vmatprep.mubr.f32.mxu0 0.0
  %1902 = vmatmul.mubr.f32.gmra.mrb[0].mxu0 %v1620
  %v1903 = vpop.f32.mrb[0].mxu0
  %v1904 = vadd.f32 %v1506, %v1903
  %v1905 = vpop.f32.mrb[0].mxu0
  %1906 = vmatprep.mubr.f32.mxu0 0.0
  %1907 = vmatmul.mubr.f32.gmra.mrb[0].mxu0 %v1623
  %v1908 = vpop.f32.mrb[0].mxu0
  %v1909 = vadd.f32 %v1506, %v1908
  %v1910 = vpop.f32.mrb[0].mxu0
  %1911 = vmatprep.mubr.f32.mxu0 0.0
  %1912 = vmatmul.mubr.f32.gmra.mrb[0].mxu0 %v1626
  %v1913 = vpop.f32.mrb[0].mxu0
  %v1914 = vadd.f32 %v1506, %v1913
  %v1915 = vpop.f32.mrb[0].mxu0
  %1916 = vmatprep.mubr.f32.mxu0 0.0
  %1917 = vmatmul.mubr.f32.gmra.mrb[0].mxu0 %v1629
  %v1918 = vpop.f32.mrb[0].mxu0
  %v1919 = vadd.f32 %v1506, %v1918
  %v1920 = vpop.f32.mrb[0].mxu0
  %1921 = vmatprep.mubr.f32.mxu0 0.0
  %1922 = vmatmul.mubr.f32.gmra.mrb[0].mxu0 %v1632
  %v1923 = vpop.f32.mrb[0].mxu0
  %v1924 = vadd.f32 %v1506, %v1923
  %v1925 = vpop.f32.mrb[0].mxu0
  %1926 = vmatprep.mubr.f32.mxu0 0.0
  %1927 = vmatmul.mubr.f32.gmra.mrb[0].mxu0 %v1635
  %v1928 = vpop.f32.mrb[0].mxu0
  %v1929 = vadd.f32 %v1506, %v1928
  %v1930 = vpop.f32.mrb[0].mxu0
  %1931 = vmatprep.mubr.f32.mxu0 0.0
  %1932 = vmatmul.mubr.f32.gmra.mrb[0].mxu0 %v1638
  %v1933 = vpop.f32.mrb[0].mxu0
  %v1934 = vadd.f32 %v1506, %v1933
  %v1935 = vpop.f32.mrb[0].mxu0
  %1936 = vmatprep.mubr.f32.mxu0 0.0
  %1937 = vmatmul.mubr.f32.gmra.mrb[0].mxu0 %v1641
  %v1938 = vpop.f32.mrb[0].mxu0
  %v1939 = vadd.f32 %v1506, %v1938
  %v1940 = vpop.f32.mrb[0].mxu0
  %1941 = vmatprep.mubr.f32.mxu0 0.0
  %1942 = vmatmul.mubr.f32.gmra.mrb[0].mxu0 %v1644
  %v1943 = vpop.f32.mrb[0].mxu0
  %v1944 = vadd.f32 %v1506, %v1943
  %v1945 = vpop.f32.mrb[0].mxu0
  %1946 = vmatprep.mubr.f32.mxu0 0.0
  %1947 = vmatmul.mubr.f32.gmra.mrb[0].mxu0 %v1647
  %v1948 = vpop.f32.mrb[0].mxu0
  %v1949 = vadd.f32 %v1506, %v1948
  %v1950 = vpop.f32.mrb[0].mxu0
  %1951 = vmatprep.mubr.f32.mxu0 0.0
  %1952 = vmatmul.mubr.f32.gmra.mrb[0].mxu0 %v1650
  %v1953 = vpop.f32.mrb[0].mxu0
  %v1954 = vadd.f32 %v1506, %v1953
  %v1955 = vpop.f32.mrb[0].mxu0
  %1956 = vdwg.mxu0
  %vm1957 = vcmask 23552
  %1958 = vst.msk [vmem:[%s11] sm:$0xff] %vm1957, %v1719
  %1959 = vst.msk [vmem:[%s11 + $0x8] sm:$0xff] %vm1957, %v1724
  %1960 = vst.msk [vmem:[%s11 + $0x10] sm:$0xff] %vm1957, %v1729
  %1961 = vst.msk [vmem:[%s11 + $0x18] sm:$0xff] %vm1957, %v1734
  %1962 = vst.msk [vmem:[%s11 + $0x20] sm:$0xff] %vm1957, %v1739
  %1963 = vst.msk [vmem:[%s11 + $0x28] sm:$0xff] %vm1957, %v1744
  %1964 = vst.msk [vmem:[%s11 + $0x30] sm:$0xff] %vm1957, %v1749
  %1965 = vst.msk [vmem:[%s11 + $0x38] sm:$0xff] %vm1957, %v1754
  %1966 = vst.msk [vmem:[%s11 + $0x40] sm:$0xff] %vm1957, %v1759
  %1967 = vst.msk [vmem:[%s11 + $0x48] sm:$0xff] %vm1957, %v1764
  %1968 = vst.msk [vmem:[%s11 + $0x50] sm:$0xff] %vm1957, %v1769
  %1969 = vst.msk [vmem:[%s11 + $0x58] sm:$0xff] %vm1957, %v1774
  %1970 = vst.msk [vmem:[%s11 + $0x60] sm:$0xff] %vm1957, %v1779
  %1971 = vst.msk [vmem:[%s11 + $0x68] sm:$0xff] %vm1957, %v1784
  %1972 = vst.msk [vmem:[%s11 + $0x70] sm:$0xff] %vm1957, %v1789
  %1973 = vst.msk [vmem:[%s11 + $0x78] sm:$0xff] %vm1957, %v1794
  %1974 = vst.msk [vmem:[%s11 + $0x80] sm:$0xff] %vm1957, %v1799
  %1975 = vst.msk [vmem:[%s11 + $0x88] sm:$0xff] %vm1957, %v1804
  %1976 = vst.msk [vmem:[%s11 + $0x90] sm:$0xff] %vm1957, %v1809
  %1977 = vst.msk [vmem:[%s11 + $0x98] sm:$0xff] %vm1957, %v1814
  %1978 = vst.msk [vmem:[%s11 + $0xa0] sm:$0xff] %vm1957, %v1819
  %1979 = vst.msk [vmem:[%s11 + $0xa8] sm:$0xff] %vm1957, %v1824
  %1980 = vst.msk [vmem:[%s11 + $0xb0] sm:$0xff] %vm1957, %v1829
  %1981 = vst.msk [vmem:[%s11 + $0xb8] sm:$0xff] %vm1957, %v1834
  %1982 = vst.msk [vmem:[%s11 + $0xc0] sm:$0xff] %vm1957, %v1839
  %1983 = vst.msk [vmem:[%s11 + $0xc8] sm:$0xff] %vm1957, %v1844
  %1984 = vst.msk [vmem:[%s11 + $0xd0] sm:$0xff] %vm1957, %v1849
  %1985 = vst.msk [vmem:[%s11 + $0xd8] sm:$0xff] %vm1957, %v1854
  %1986 = vst.msk [vmem:[%s11 + $0xe0] sm:$0xff] %vm1957, %v1859
  %1987 = vst.msk [vmem:[%s11 + $0xe8] sm:$0xff] %vm1957, %v1864
  %1988 = vst.msk [vmem:[%s11 + $0xf0] sm:$0xff] %vm1957, %v1869
  %1989 = vst.msk [vmem:[%s11 + $0xf8] sm:$0xff] %vm1957, %v1874
  %1990 = vst.msk [vmem:[%s11 + $0x100] sm:$0xff] %vm1957, %v1879
  %1991 = vst.msk [vmem:[%s11 + $0x108] sm:$0xff] %vm1957, %v1884
  %1992 = vst.msk [vmem:[%s11 + $0x110] sm:$0xff] %vm1957, %v1889
  %1993 = vst.msk [vmem:[%s11 + $0x118] sm:$0xff] %vm1957, %v1894
  %1994 = vst.msk [vmem:[%s11 + $0x120] sm:$0xff] %vm1957, %v1899
  %1995 = vst.msk [vmem:[%s11 + $0x128] sm:$0xff] %vm1957, %v1904
  %1996 = vst.msk [vmem:[%s11 + $0x130] sm:$0xff] %vm1957, %v1909
  %1997 = vst.msk [vmem:[%s11 + $0x138] sm:$0xff] %vm1957, %v1914
  %1998 = vst.msk [vmem:[%s11 + $0x140] sm:$0xff] %vm1957, %v1919
  %1999 = vst.msk [vmem:[%s11 + $0x148] sm:$0xff] %vm1957, %v1924
  %2000 = vst.msk [vmem:[%s11 + $0x150] sm:$0xff] %vm1957, %v1929
  %2001 = vst.msk [vmem:[%s11 + $0x158] sm:$0xff] %vm1957, %v1934
  %2002 = vst.msk [vmem:[%s11 + $0x160] sm:$0xff] %vm1957, %v1939
  %2003 = vst.msk [vmem:[%s11 + $0x168] sm:$0xff] %vm1957, %v1944
  %2004 = vst.msk [vmem:[%s11 + $0x170] sm:$0xff] %vm1957, %v1949
  %2005 = vst.msk [vmem:[%s11 + $0x178] sm:$0xff] %vm1957, %v1954
  %v2006 = vld [vmem:[%s8] sm:$0x1]
  %v2007 = vsub.f32 0.0, %v2006
  %v2009 = vlaneseq
  %v2010 = vshrl.u32 %v2009, 7
  %v2011 = vsub.s32 0, %v2010
  %v2012 = vrot.slane %v2006, %v2011
  %vm2014 = vcmp.gt.f32.partialorder %v1719, %v2012
  %vm2015 = vcmp.gt.f32.partialorder %v1724, %v2012
  %vm2016 = vcmp.gt.f32.partialorder %v1729, %v2012
  %vm2017 = vcmp.gt.f32.partialorder %v1734, %v2012
  %vm2018 = vcmp.gt.f32.partialorder %v1739, %v2012
  %vm2019 = vcmp.gt.f32.partialorder %v1744, %v2012
  %vm2020 = vcmp.gt.f32.partialorder %v1749, %v2012
  %vm2021 = vcmp.gt.f32.partialorder %v1754, %v2012
  %vm2022 = vcmp.gt.f32.partialorder %v1759, %v2012
  %vm2023 = vcmp.gt.f32.partialorder %v1764, %v2012
  %vm2024 = vcmp.gt.f32.partialorder %v1769, %v2012
  %vm2025 = vcmp.gt.f32.partialorder %v1774, %v2012
  %vm2026 = vcmp.gt.f32.partialorder %v1779, %v2012
  %vm2027 = vcmp.gt.f32.partialorder %v1784, %v2012
  %vm2028 = vcmp.gt.f32.partialorder %v1789, %v2012
  %vm2029 = vcmp.gt.f32.partialorder %v1794, %v2012
  %vm2030 = vcmp.gt.f32.partialorder %v1799, %v2012
  %vm2031 = vcmp.gt.f32.partialorder %v1804, %v2012
  %vm2032 = vcmp.gt.f32.partialorder %v1809, %v2012
  %vm2033 = vcmp.gt.f32.partialorder %v1814, %v2012
  %vm2034 = vcmp.gt.f32.partialorder %v1819, %v2012
  %vm2035 = vcmp.gt.f32.partialorder %v1824, %v2012
  %vm2036 = vcmp.gt.f32.partialorder %v1829, %v2012
  %vm2037 = vcmp.gt.f32.partialorder %v1834, %v2012
  %vm2038 = vcmp.gt.f32.partialorder %v1839, %v2012
  %vm2039 = vcmp.gt.f32.partialorder %v1844, %v2012
  %vm2040 = vcmp.gt.f32.partialorder %v1849, %v2012
  %vm2041 = vcmp.gt.f32.partialorder %v1854, %v2012
  %vm2042 = vcmp.gt.f32.partialorder %v1859, %v2012
  %vm2043 = vcmp.gt.f32.partialorder %v1864, %v2012
  %vm2044 = vcmp.gt.f32.partialorder %v1869, %v2012
  %vm2045 = vcmp.gt.f32.partialorder %v1874, %v2012
  %vm2046 = vcmp.gt.f32.partialorder %v1879, %v2012
  %vm2047 = vcmp.gt.f32.partialorder %v1884, %v2012
  %vm2048 = vcmp.gt.f32.partialorder %v1889, %v2012
  %vm2049 = vcmp.gt.f32.partialorder %v1894, %v2012
  %vm2050 = vcmp.gt.f32.partialorder %v1899, %v2012
  %vm2051 = vcmp.gt.f32.partialorder %v1904, %v2012
  %vm2052 = vcmp.gt.f32.partialorder %v1909, %v2012
  %vm2053 = vcmp.gt.f32.partialorder %v1914, %v2012
  %vm2054 = vcmp.gt.f32.partialorder %v1919, %v2012
  %vm2055 = vcmp.gt.f32.partialorder %v1924, %v2012
  %vm2056 = vcmp.gt.f32.partialorder %v1929, %v2012
  %vm2057 = vcmp.gt.f32.partialorder %v1934, %v2012
  %vm2058 = vcmp.gt.f32.partialorder %v1939, %v2012
  %vm2059 = vcmp.gt.f32.partialorder %v1944, %v2012
  %vm2060 = vcmp.gt.f32.partialorder %v1949, %v2012
  %vm2061 = vcmp.gt.f32.partialorder %v1954, %v2012
  %v2062 = vsel %vm2014, %v1719, %v2012
  %v2063 = vsel %vm2015, %v1724, %v2012
  %v2064 = vsel %vm2016, %v1729, %v2012
  %v2065 = vsel %vm2017, %v1734, %v2012
  %v2066 = vsel %vm2018, %v1739, %v2012
  %v2067 = vsel %vm2019, %v1744, %v2012
  %v2068 = vsel %vm2020, %v1749, %v2012
  %v2069 = vsel %vm2021, %v1754, %v2012
  %v2070 = vsel %vm2022, %v1759, %v2012
  %v2071 = vsel %vm2023, %v1764, %v2012
  %v2072 = vsel %vm2024, %v1769, %v2012
  %v2073 = vsel %vm2025, %v1774, %v2012
  %v2074 = vsel %vm2026, %v1779, %v2012
  %v2075 = vsel %vm2027, %v1784, %v2012
  %v2076 = vsel %vm2028, %v1789, %v2012
  %v2077 = vsel %vm2029, %v1794, %v2012
  %v2078 = vsel %vm2030, %v1799, %v2012
  %v2079 = vsel %vm2031, %v1804, %v2012
  %v2080 = vsel %vm2032, %v1809, %v2012
  %v2081 = vsel %vm2033, %v1814, %v2012
  %v2082 = vsel %vm2034, %v1819, %v2012
  %v2083 = vsel %vm2035, %v1824, %v2012
  %v2084 = vsel %vm2036, %v1829, %v2012
  %v2085 = vsel %vm2037, %v1834, %v2012
  %v2086 = vsel %vm2038, %v1839, %v2012
  %v2087 = vsel %vm2039, %v1844, %v2012
  %v2088 = vsel %vm2040, %v1849, %v2012
  %v2089 = vsel %vm2041, %v1854, %v2012
  %v2090 = vsel %vm2042, %v1859, %v2012
  %v2091 = vsel %vm2043, %v1864, %v2012
  %v2092 = vsel %vm2044, %v1869, %v2012
  %v2093 = vsel %vm2045, %v1874, %v2012
  %v2094 = vsel %vm2046, %v1879, %v2012
  %v2095 = vsel %vm2047, %v1884, %v2012
  %v2096 = vsel %vm2048, %v1889, %v2012
  %v2097 = vsel %vm2049, %v1894, %v2012
  %v2098 = vsel %vm2050, %v1899, %v2012
  %v2099 = vsel %vm2051, %v1904, %v2012
  %v2100 = vsel %vm2052, %v1909, %v2012
  %v2101 = vsel %vm2053, %v1914, %v2012
  %v2102 = vsel %vm2054, %v1919, %v2012
  %v2103 = vsel %vm2055, %v1924, %v2012
  %v2104 = vsel %vm2056, %v1929, %v2012
  %v2105 = vsel %vm2057, %v1934, %v2012
  %v2106 = vsel %vm2058, %v1939, %v2012
  %v2107 = vsel %vm2059, %v1944, %v2012
  %v2108 = vsel %vm2060, %v1949, %v2012
  %v2109 = vsel %vm2061, %v1954, %v2012
  %v2111 = vlaneseq
  %v2112 = vshrl.u32 %v2111, 7
  %v2113 = vsub.s32 0, %v2112
  %v2114 = vrot.slane %v2007, %v2113
  %vm2116 = vcmp.lt.f32.partialorder %v2062, %v2114
  %vm2117 = vcmp.lt.f32.partialorder %v2063, %v2114
  %vm2118 = vcmp.lt.f32.partialorder %v2064, %v2114
  %vm2119 = vcmp.lt.f32.partialorder %v2065, %v2114
  %vm2120 = vcmp.lt.f32.partialorder %v2066, %v2114
  %vm2121 = vcmp.lt.f32.partialorder %v2067, %v2114
  %vm2122 = vcmp.lt.f32.partialorder %v2068, %v2114
  %vm2123 = vcmp.lt.f32.partialorder %v2069, %v2114
  %vm2124 = vcmp.lt.f32.partialorder %v2070, %v2114
  %vm2125 = vcmp.lt.f32.partialorder %v2071, %v2114
  %vm2126 = vcmp.lt.f32.partialorder %v2072, %v2114
  %vm2127 = vcmp.lt.f32.partialorder %v2073, %v2114
  %vm2128 = vcmp.lt.f32.partialorder %v2074, %v2114
  %vm2129 = vcmp.lt.f32.partialorder %v2075, %v2114
  %vm2130 = vcmp.lt.f32.partialorder %v2076, %v2114
  %vm2131 = vcmp.lt.f32.partialorder %v2077, %v2114
  %vm2132 = vcmp.lt.f32.partialorder %v2078, %v2114
  %vm2133 = vcmp.lt.f32.partialorder %v2079, %v2114
  %vm2134 = vcmp.lt.f32.partialorder %v2080, %v2114
  %vm2135 = vcmp.lt.f32.partialorder %v2081, %v2114
  %vm2136 = vcmp.lt.f32.partialorder %v2082, %v2114
  %vm2137 = vcmp.lt.f32.partialorder %v2083, %v2114
  %vm2138 = vcmp.lt.f32.partialorder %v2084, %v2114
  %vm2139 = vcmp.lt.f32.partialorder %v2085, %v2114
  %vm2140 = vcmp.lt.f32.partialorder %v2086, %v2114
  %vm2141 = vcmp.lt.f32.partialorder %v2087, %v2114
  %vm2142 = vcmp.lt.f32.partialorder %v2088, %v2114
  %vm2143 = vcmp.lt.f32.partialorder %v2089, %v2114
  %vm2144 = vcmp.lt.f32.partialorder %v2090, %v2114
  %vm2145 = vcmp.lt.f32.partialorder %v2091, %v2114
  %vm2146 = vcmp.lt.f32.partialorder %v2092, %v2114
  %vm2147 = vcmp.lt.f32.partialorder %v2093, %v2114
  %vm2148 = vcmp.lt.f32.partialorder %v2094, %v2114
  %vm2149 = vcmp.lt.f32.partialorder %v2095, %v2114
  %vm2150 = vcmp.lt.f32.partialorder %v2096, %v2114
  %vm2151 = vcmp.lt.f32.partialorder %v2097, %v2114
  %vm2152 = vcmp.lt.f32.partialorder %v2098, %v2114
  %vm2153 = vcmp.lt.f32.partialorder %v2099, %v2114
  %vm2154 = vcmp.lt.f32.partialorder %v2100, %v2114
  %vm2155 = vcmp.lt.f32.partialorder %v2101, %v2114
  %vm2156 = vcmp.lt.f32.partialorder %v2102, %v2114
  %vm2157 = vcmp.lt.f32.partialorder %v2103, %v2114
  %vm2158 = vcmp.lt.f32.partialorder %v2104, %v2114
  %vm2159 = vcmp.lt.f32.partialorder %v2105, %v2114
  %vm2160 = vcmp.lt.f32.partialorder %v2106, %v2114
  %vm2161 = vcmp.lt.f32.partialorder %v2107, %v2114
  %vm2162 = vcmp.lt.f32.partialorder %v2108, %v2114
  %vm2163 = vcmp.lt.f32.partialorder %v2109, %v2114
  %v2164 = vsel %vm2116, %v2062, %v2114
  %v2165 = vsel %vm2117, %v2063, %v2114
  %v2166 = vsel %vm2118, %v2064, %v2114
  %v2167 = vsel %vm2119, %v2065, %v2114
  %v2168 = vsel %vm2120, %v2066, %v2114
  %v2169 = vsel %vm2121, %v2067, %v2114
  %v2170 = vsel %vm2122, %v2068, %v2114
  %v2171 = vsel %vm2123, %v2069, %v2114
  %v2172 = vsel %vm2124, %v2070, %v2114
  %v2173 = vsel %vm2125, %v2071, %v2114
  %v2174 = vsel %vm2126, %v2072, %v2114
  %v2175 = vsel %vm2127, %v2073, %v2114
  %v2176 = vsel %vm2128, %v2074, %v2114
  %v2177 = vsel %vm2129, %v2075, %v2114
  %v2178 = vsel %vm2130, %v2076, %v2114
  %v2179 = vsel %vm2131, %v2077, %v2114
  %v2180 = vsel %vm2132, %v2078, %v2114
  %v2181 = vsel %vm2133, %v2079, %v2114
  %v2182 = vsel %vm2134, %v2080, %v2114
  %v2183 = vsel %vm2135, %v2081, %v2114
  %v2184 = vsel %vm2136, %v2082, %v2114
  %v2185 = vsel %vm2137, %v2083, %v2114
  %v2186 = vsel %vm2138, %v2084, %v2114
  %v2187 = vsel %vm2139, %v2085, %v2114
  %v2188 = vsel %vm2140, %v2086, %v2114
  %v2189 = vsel %vm2141, %v2087, %v2114
  %v2190 = vsel %vm2142, %v2088, %v2114
  %v2191 = vsel %vm2143, %v2089, %v2114
  %v2192 = vsel %vm2144, %v2090, %v2114
  %v2193 = vsel %vm2145, %v2091, %v2114
  %v2194 = vsel %vm2146, %v2092, %v2114
  %v2195 = vsel %vm2147, %v2093, %v2114
  %v2196 = vsel %vm2148, %v2094, %v2114
  %v2197 = vsel %vm2149, %v2095, %v2114
  %v2198 = vsel %vm2150, %v2096, %v2114
  %v2199 = vsel %vm2151, %v2097, %v2114
  %v2200 = vsel %vm2152, %v2098, %v2114
  %v2201 = vsel %vm2153, %v2099, %v2114
  %v2202 = vsel %vm2154, %v2100, %v2114
  %v2203 = vsel %vm2155, %v2101, %v2114
  %v2204 = vsel %vm2156, %v2102, %v2114
  %v2205 = vsel %vm2157, %v2103, %v2114
  %v2206 = vsel %vm2158, %v2104, %v2114
  %v2207 = vsel %vm2159, %v2105, %v2114
  %v2208 = vsel %vm2160, %v2106, %v2114
  %v2209 = vsel %vm2161, %v2107, %v2114
  %v2210 = vsel %vm2162, %v2108, %v2114
  %v2211 = vsel %vm2163, %v2109, %v2114
  %v2212 = vld [vmem:[%s0] sm:$0xff]
  %v2213 = vld [vmem:[%s0 + $0x8] sm:$0xff]
  %v2214 = vld [vmem:[%s0 + $0x10] sm:$0xff]
  %v2215 = vld [vmem:[%s0 + $0x18] sm:$0xff]
  %v2216 = vld [vmem:[%s0 + $0x20] sm:$0xff]
  %v2217 = vld [vmem:[%s0 + $0x28] sm:$0xff]
  %v2218 = vld [vmem:[%s0 + $0x30] sm:$0xff]
  %v2219 = vld [vmem:[%s0 + $0x38] sm:$0xff]
  %v2220 = vld [vmem:[%s0 + $0x40] sm:$0xff]
  %v2221 = vld [vmem:[%s0 + $0x48] sm:$0xff]
  %v2222 = vld [vmem:[%s0 + $0x50] sm:$0xff]
  %v2223 = vld [vmem:[%s0 + $0x58] sm:$0xff]
  %v2224 = vld [vmem:[%s0 + $0x60] sm:$0xff]
  %v2225 = vld [vmem:[%s0 + $0x68] sm:$0xff]
  %v2226 = vld [vmem:[%s0 + $0x70] sm:$0xff]
  %v2227 = vld [vmem:[%s0 + $0x78] sm:$0xff]
  %v2228 = vld [vmem:[%s0 + $0x80] sm:$0xff]
  %v2229 = vld [vmem:[%s0 + $0x88] sm:$0xff]
  %v2230 = vld [vmem:[%s0 + $0x90] sm:$0xff]
  %v2231 = vld [vmem:[%s0 + $0x98] sm:$0xff]
  %v2232 = vld [vmem:[%s0 + $0xa0] sm:$0xff]
  %v2233 = vld [vmem:[%s0 + $0xa8] sm:$0xff]
  %v2234 = vld [vmem:[%s0 + $0xb0] sm:$0xff]
  %v2235 = vld [vmem:[%s0 + $0xb8] sm:$0xff]
  %v2236 = vld [vmem:[%s0 + $0xc0] sm:$0xff]
  %v2237 = vld [vmem:[%s0 + $0xc8] sm:$0xff]
  %v2238 = vld [vmem:[%s0 + $0xd0] sm:$0xff]
  %v2239 = vld [vmem:[%s0 + $0xd8] sm:$0xff]
  %v2240 = vld [vmem:[%s0 + $0xe0] sm:$0xff]
  %v2241 = vld [vmem:[%s0 + $0xe8] sm:$0xff]
  %v2242 = vld [vmem:[%s0 + $0xf0] sm:$0xff]
  %v2243 = vld [vmem:[%s0 + $0xf8] sm:$0xff]
  %v2244 = vld [vmem:[%s0 + $0x100] sm:$0xff]
  %v2245 = vld [vmem:[%s0 + $0x108] sm:$0xff]
  %v2246 = vld [vmem:[%s0 + $0x110] sm:$0xff]
  %v2247 = vld [vmem:[%s0 + $0x118] sm:$0xff]
  %v2248 = vld [vmem:[%s0 + $0x120] sm:$0xff]
  %v2249 = vld [vmem:[%s0 + $0x128] sm:$0xff]
  %v2250 = vld [vmem:[%s0 + $0x130] sm:$0xff]
  %v2251 = vld [vmem:[%s0 + $0x138] sm:$0xff]
  %v2252 = vld [vmem:[%s0 + $0x140] sm:$0xff]
  %v2253 = vld [vmem:[%s0 + $0x148] sm:$0xff]
  %v2254 = vld [vmem:[%s0 + $0x150] sm:$0xff]
  %v2255 = vld [vmem:[%s0 + $0x158] sm:$0xff]
  %v2256 = vld [vmem:[%s0 + $0x160] sm:$0xff]
  %v2257 = vld [vmem:[%s0 + $0x168] sm:$0xff]
  %v2258 = vld [vmem:[%s0 + $0x170] sm:$0xff]
  %v2259 = vld [vmem:[%s0 + $0x178] sm:$0xff]
  %v2260 = vadd.f32 %v2212, %v2164
  %v2261 = vadd.f32 %v2213, %v2165
  %v2262 = vadd.f32 %v2214, %v2166
  %v2263 = vadd.f32 %v2215, %v2167
  %v2264 = vadd.f32 %v2216, %v2168
  %v2265 = vadd.f32 %v2217, %v2169
  %v2266 = vadd.f32 %v2218, %v2170
  %v2267 = vadd.f32 %v2219, %v2171
  %v2268 = vadd.f32 %v2220, %v2172
  %v2269 = vadd.f32 %v2221, %v2173
  %v2270 = vadd.f32 %v2222, %v2174
  %v2271 = vadd.f32 %v2223, %v2175
  %v2272 = vadd.f32 %v2224, %v2176
  %v2273 = vadd.f32 %v2225, %v2177
  %v2274 = vadd.f32 %v2226, %v2178
  %v2275 = vadd.f32 %v2227, %v2179
  %v2276 = vadd.f32 %v2228, %v2180
  %v2277 = vadd.f32 %v2229, %v2181
  %v2278 = vadd.f32 %v2230, %v2182
  %v2279 = vadd.f32 %v2231, %v2183
  %v2280 = vadd.f32 %v2232, %v2184
  %v2281 = vadd.f32 %v2233, %v2185
  %v2282 = vadd.f32 %v2234, %v2186
  %v2283 = vadd.f32 %v2235, %v2187
  %v2284 = vadd.f32 %v2236, %v2188
  %v2285 = vadd.f32 %v2237, %v2189
  %v2286 = vadd.f32 %v2238, %v2190
  %v2287 = vadd.f32 %v2239, %v2191
  %v2288 = vadd.f32 %v2240, %v2192
  %v2289 = vadd.f32 %v2241, %v2193
  %v2290 = vadd.f32 %v2242, %v2194
  %v2291 = vadd.f32 %v2243, %v2195
  %v2292 = vadd.f32 %v2244, %v2196
  %v2293 = vadd.f32 %v2245, %v2197
  %v2294 = vadd.f32 %v2246, %v2198
  %v2295 = vadd.f32 %v2247, %v2199
  %v2296 = vadd.f32 %v2248, %v2200
  %v2297 = vadd.f32 %v2249, %v2201
  %v2298 = vadd.f32 %v2250, %v2202
  %v2299 = vadd.f32 %v2251, %v2203
  %v2300 = vadd.f32 %v2252, %v2204
  %v2301 = vadd.f32 %v2253, %v2205
  %v2302 = vadd.f32 %v2254, %v2206
  %v2303 = vadd.f32 %v2255, %v2207
  %v2304 = vadd.f32 %v2256, %v2208
  %v2305 = vadd.f32 %v2257, %v2209
  %v2306 = vadd.f32 %v2258, %v2210
  %v2307 = vadd.f32 %v2259, %v2211
  %2308 = vst.msk [vmem:[%s9] sm:$0xff] %vm1957, %v2260
  %2309 = vst.msk [vmem:[%s9 + $0x8] sm:$0xff] %vm1957, %v2261
  %2310 = vst.msk [vmem:[%s9 + $0x10] sm:$0xff] %vm1957, %v2262
  %2311 = vst.msk [vmem:[%s9 + $0x18] sm:$0xff] %vm1957, %v2263
  %2312 = vst.msk [vmem:[%s9 + $0x20] sm:$0xff] %vm1957, %v2264
  %2313 = vst.msk [vmem:[%s9 + $0x28] sm:$0xff] %vm1957, %v2265
  %2314 = vst.msk [vmem:[%s9 + $0x30] sm:$0xff] %vm1957, %v2266
  %2315 = vst.msk [vmem:[%s9 + $0x38] sm:$0xff] %vm1957, %v2267
  %2316 = vst.msk [vmem:[%s9 + $0x40] sm:$0xff] %vm1957, %v2268
  %2317 = vst.msk [vmem:[%s9 + $0x48] sm:$0xff] %vm1957, %v2269
  %2318 = vst.msk [vmem:[%s9 + $0x50] sm:$0xff] %vm1957, %v2270
  %2319 = vst.msk [vmem:[%s9 + $0x58] sm:$0xff] %vm1957, %v2271
  %2320 = vst.msk [vmem:[%s9 + $0x60] sm:$0xff] %vm1957, %v2272
  %2321 = vst.msk [vmem:[%s9 + $0x68] sm:$0xff] %vm1957, %v2273
  %2322 = vst.msk [vmem:[%s9 + $0x70] sm:$0xff] %vm1957, %v2274
  %2323 = vst.msk [vmem:[%s9 + $0x78] sm:$0xff] %vm1957, %v2275
  %2324 = vst.msk [vmem:[%s9 + $0x80] sm:$0xff] %vm1957, %v2276
  %2325 = vst.msk [vmem:[%s9 + $0x88] sm:$0xff] %vm1957, %v2277
  %2326 = vst.msk [vmem:[%s9 + $0x90] sm:$0xff] %vm1957, %v2278
  %2327 = vst.msk [vmem:[%s9 + $0x98] sm:$0xff] %vm1957, %v2279
  %2328 = vst.msk [vmem:[%s9 + $0xa0] sm:$0xff] %vm1957, %v2280
  %2329 = vst.msk [vmem:[%s9 + $0xa8] sm:$0xff] %vm1957, %v2281
  %2330 = vst.msk [vmem:[%s9 + $0xb0] sm:$0xff] %vm1957, %v2282
  %2331 = vst.msk [vmem:[%s9 + $0xb8] sm:$0xff] %vm1957, %v2283
  %2332 = vst.msk [vmem:[%s9 + $0xc0] sm:$0xff] %vm1957, %v2284
  %2333 = vst.msk [vmem:[%s9 + $0xc8] sm:$0xff] %vm1957, %v2285
  %2334 = vst.msk [vmem:[%s9 + $0xd0] sm:$0xff] %vm1957, %v2286
  %2335 = vst.msk [vmem:[%s9 + $0xd8] sm:$0xff] %vm1957, %v2287
  %2336 = vst.msk [vmem:[%s9 + $0xe0] sm:$0xff] %vm1957, %v2288
  %2337 = vst.msk [vmem:[%s9 + $0xe8] sm:$0xff] %vm1957, %v2289
  %2338 = vst.msk [vmem:[%s9 + $0xf0] sm:$0xff] %vm1957, %v2290
  %2339 = vst.msk [vmem:[%s9 + $0xf8] sm:$0xff] %vm1957, %v2291
  %2340 = vst.msk [vmem:[%s9 + $0x100] sm:$0xff] %vm1957, %v2292
  %2341 = vst.msk [vmem:[%s9 + $0x108] sm:$0xff] %vm1957, %v2293
  %2342 = vst.msk [vmem:[%s9 + $0x110] sm:$0xff] %vm1957, %v2294
  %2343 = vst.msk [vmem:[%s9 + $0x118] sm:$0xff] %vm1957, %v2295
  %2344 = vst.msk [vmem:[%s9 + $0x120] sm:$0xff] %vm1957, %v2296
  %2345 = vst.msk [vmem:[%s9 + $0x128] sm:$0xff] %vm1957, %v2297
  %2346 = vst.msk [vmem:[%s9 + $0x130] sm:$0xff] %vm1957, %v2298
  %2347 = vst.msk [vmem:[%s9 + $0x138] sm:$0xff] %vm1957, %v2299
  %2348 = vst.msk [vmem:[%s9 + $0x140] sm:$0xff] %vm1957, %v2300
  %2349 = vst.msk [vmem:[%s9 + $0x148] sm:$0xff] %vm1957, %v2301
  %2350 = vst.msk [vmem:[%s9 + $0x150] sm:$0xff] %vm1957, %v2302
  %2351 = vst.msk [vmem:[%s9 + $0x158] sm:$0xff] %vm1957, %v2303
  %2352 = vst.msk [vmem:[%s9 + $0x160] sm:$0xff] %vm1957, %v2304
  %2353 = vst.msk [vmem:[%s9 + $0x168] sm:$0xff] %vm1957, %v2305
  %2354 = vst.msk [vmem:[%s9 + $0x170] sm:$0xff] %vm1957, %v2306
  %2355 = vst.msk [vmem:[%s9 + $0x178] sm:$0xff] %vm1957, %v2307
  // Predicated region
  $region38: #{vote_layer_forward.1} parent=0 // pred_check
    _
  $region39: #{vote_layer_forward.1} parent=0 // pred_check_branch
    %2357 = sbr.rel (0) target = $region41
  $region40: #{vote_layer_forward.1} parent=0 // pred_region
    _
  $region41: #{vote_layer_forward.1} parent=0 // pred_fallthru
    _
  // Predicated region
  $region42: #{vote_layer_forward.1} parent=0 // pred_check
    _
  $region43: #{vote_layer_forward.1} parent=0 // pred_check_branch
    %2359 = sbr.rel (0) target = $region45
  $region44: #{vote_layer_forward.1} parent=0 // pred_region
    _
  $region45: #{vote_layer_forward.1} parent=0 // pred_fallthru
    _
  // Predicated region
  $region46: #{vote_layer_forward.1} parent=0 // pred_check
    _
  $region47: #{vote_layer_forward.1} parent=0 // pred_check_branch
    %2361 = sbr.rel (0) target = $region49
  $region48: #{vote_layer_forward.1} parent=0 // pred_region
    _
  $region49: #{vote_layer_forward.1} parent=0 // pred_fallthru
    _
  // Predicated region
  $region50: #{vote_layer_forward.1} parent=0 // pred_check
    _
  $region51: #{vote_layer_forward.1} parent=0 // pred_check_branch
    %2363 = sbr.rel (0) target = $region53
  $region52: #{vote_layer_forward.1} parent=0 // pred_region
    _
  $region53: #{vote_layer_forward.1} parent=0 // pred_fallthru
    _
  // Predicated region
  $region54: #{vote_layer_forward.1} parent=0 // pred_check
    _
  $region55: #{vote_layer_forward.1} parent=0 // pred_check_branch
    %2365 = sbr.rel (0) target = $region57
  $region56: #{vote_layer_forward.1} parent=0 // pred_region
    _
  $region57: #{vote_layer_forward.1} parent=0 // pred_fallthru
    _
  // Predicated region
  $region58: #{vote_layer_forward.1} parent=0 // pred_check
    _
  $region59: #{vote_layer_forward.1} parent=0 // pred_check_branch
    %2367 = sbr.rel (0) target = $region61
  $region60: #{vote_layer_forward.1} parent=0 // pred_region
    _
  $region61: #{vote_layer_forward.1} parent=0 // pred_fallthru
    _

</llo_original>
